<compile_context>
chip_gen: v7x
topology: tpu7x:2x2x1
jax: 0.10.0
libtpu: 0.0.40
codegen_flags: <defaults>
</compile_context>

<pallas_src>
import math
import numpy as np
import jax
import jax.numpy as jnp
from jax.experimental import pallas as pl
from jax.experimental.pallas import tpu as pltpu


def _gaussian_kernel_1d(kernel_size: int, sigma: float) -> np.ndarray:
    """Normalized 1D gaussian. The module's 2D kernel is exactly outer(g, g)/sum."""
    ax = np.arange(kernel_size, dtype=np.float64)
    mean = (kernel_size - 1) / 2.0
    g = (1.0 / (sigma * math.sqrt(2.0 * math.pi))) * np.exp(
        -(((ax - mean) / sigma) ** 2) / 2.0
    )
    g = g / g.sum()
    return g.astype(np.float32)


def _gaussian_kernel_2d(kernel_size: int, sigma: float) -> np.ndarray:
    """Same construction as GaussianSmoothing.__init__ (dim=2); used by the reference."""
    ax = np.arange(kernel_size, dtype=np.float32)
    mean = (kernel_size - 1) / 2.0
    g = (1.0 / (sigma * math.sqrt(2.0 * math.pi))) * np.exp(
        -(((ax - mean) / sigma) ** 2) / 2.0
    )
    k = np.outer(g, g).astype(np.float32)
    return (k / k.sum()).astype(np.float32)


def _padded_tile_bytes(rows: int, cols: int, itemsize: int) -> int:
    """VMEM footprint of a (rows, cols) slab: tiles are (8 sublanes, 128 lanes)."""
    return ((rows + 7) // 8) * 8 * ((cols + 127) // 128) * 128 * itemsize


def _choose_block(B, H, W, Ho, Wo, itemsize):
    """Pick TB (planes per grid step) and vmem_limit_bytes, VMEM-budget aware."""
    try:
        vmem_cap = int(getattr(pltpu.get_tpu_info(), "vmem_capacity_bytes",
                               32 * 1024 * 1024))
    except Exception:
        vmem_cap = 32 * 1024 * 1024          # conservative fallback (v5e-safe-ish)
    budget = vmem_cap // 4                   # headroom for double buffers + scratch

    def block_bytes(tb):
        in_b = 2 * tb * _padded_tile_bytes(H, W, itemsize)      # double-buffered input
        out_b = 2 * tb * _padded_tile_bytes(Ho, Wo, itemsize)   # double-buffered output
        band_b = 2 * _padded_tile_bytes(W, Wo, 4)               # banded-tap matrix
        work_b = tb * (_padded_tile_bytes(H, W, 4)
                       + _padded_tile_bytes(Ho, W, 4)
                       + _padded_tile_bytes(Ho, Wo, 4))          # f32 temporaries
        return in_b + out_b + band_b + work_b

    tb = 1
    for cand in range(1, min(B, 8) + 1):     # small static unroll inside the kernel
        if B % cand:                         # exact blocks only (no ragged tail block)
            continue
        if B >= 2 and B // cand < 2:         # keep >= 2 parallel steps (v7x has 2 TCs)
            continue
        if block_bytes(cand) <= budget:
            tb = cand
    vmem_limit = int(min(vmem_cap, max(2 * block_bytes(tb) + (4 << 20), 8 << 20)))
    return tb, vmem_limit


def gaussian_smoothing(x: jax.Array, kernel_size: int, sigma: float) -> jax.Array:
    """Depthwise 2D gaussian smoothing. x: (N, C, H, W). Output: (N, C, H-K+1, W-K+1)."""
    N, C, H, W = x.shape
    K = int(kernel_size)
    if not (1 <= K <= H and K <= W):
        raise ValueError(f"kernel_size={K} must satisfy 1 <= K <= min(H={H}, W={W})")
    Ho, Wo = H - K + 1, W - K + 1

    gn = _gaussian_kernel_1d(K, sigma)
    taps = [float(g) for g in gn]            # compile-time scalar constants (pass 1)

    # Banded matrix for the horizontal pass: out[:, v] = sum_d gn[d] * acc[:, v + d].
    band_np = np.zeros((W, Wo), dtype=np.float32)
    for v in range(Wo):
        band_np[v:v + K, v] = gn
    band = jnp.asarray(band_np)

    B = N * C
    xv = x.reshape(B, H, W)                  # free view of NCHW -- no HBM pass

    itemsize = jnp.dtype(x.dtype).itemsize
    TB, vmem_limit = _choose_block(B, H, W, Ho, Wo, itemsize)
    steps = B // TB

    def kernel(band_ref, x_ref, o_ref):
        # band_ref: (W, Wo); x_ref: (TB, H, W); o_ref: (TB, Ho, Wo)   (all full H/W dims)
        b_mat = band_ref[...]
        for t in range(TB):                              # static unroll over planes
            xp = x_ref[t].astype(jnp.float32)            # load + cast the plane ONCE
            # Pass 1 -- vertical taps: sublane-offset reads of the register-resident
            # plane, accumulator initialized with the first tap (no zero-fill + add).
            acc = taps[0] * xp[0:Ho, :]
            for di in range(1, K):
                acc = acc + taps[di] * xp[di:di + Ho, :]
            # Pass 2 -- horizontal taps as a banded matmul on the (idle) MXU.  No VMEM
            # tmp store/reload, no cross-lane shifts; HIGHEST keeps full f32 accuracy.
            res = jnp.dot(acc, b_mat,
                          precision=jax.lax.Precision.HIGHEST,
                          preferred_element_type=jnp.float32)
            o_ref[t] = res.astype(o_ref.dtype)

    out = pl.pallas_call(
        kernel,
        out_shape=jax.ShapeDtypeStruct((B, Ho, Wo), x.dtype),
        grid_spec=pltpu.PrefetchScalarGridSpec(
            num_scalar_prefetch=0,
            grid=(steps,),
            in_specs=[
                pl.BlockSpec((W, Wo), lambda b: (0, 0)),         # tap band (constant)
                pl.BlockSpec((TB, H, W), lambda b: (b, 0, 0)),   # TB input planes
            ],
            out_specs=pl.BlockSpec((TB, Ho, Wo), lambda b: (b, 0, 0)),
        ),
        compiler_params=pltpu.CompilerParams(
            dimension_semantics=("parallel",),
            vmem_limit_bytes=vmem_limit,
        ),
    )(band, xv)

    return out.reshape(N, C, Ho, Wo)         # free view back to NCHW -- no HBM pass


def _reference(x, kernel_size, sigma):
    """Plain-JAX reference: depthwise conv2d, groups=C, valid padding."""
    N, C, H, W = x.shape
    wk = jnp.asarray(_gaussian_kernel_2d(kernel_size, sigma))
    w = jnp.broadcast_to(wk[None, None], (C, 1, kernel_size, kernel_size))
    return jax.lax.conv_general_dilated(
        x, w,
        window_strides=(1, 1),
        padding="VALID",
        dimension_numbers=("NCHW", "OIHW", "NCHW"),
        feature_group_count=C,
    )


if __name__ == "__main__":
    key = jax.random.PRNGKey(0)
    N, C, H, W = 2, 4, 16, 16
    kernel_size, sigma = 3, 2.0
    x = jax.random.normal(key, (N, C, H, W), dtype=jnp.float32)

    out = gaussian_smoothing(x, kernel_size, sigma)
    out = jax.block_until_ready(out)

    ref = jax.block_until_ready(_reference(x, kernel_size, sigma))
    assert out.shape == (N, C, H - kernel_size + 1, W - kernel_size + 1), out.shape
    assert jnp.allclose(out, ref, atol=1e-5, rtol=1e-5), float(jnp.max(jnp.abs(out - ref)))

    print("KERNEL_OK")
</pallas_src>

<mosaic_0001>
module attributes {stable_mosaic.version = 11 : i64} {
  func.func @kernel(%arg0: i32, %arg1: memref<16x14xf32, #tpu.memory_space<vmem>>, %arg2: memref<4x16x16xf32, #tpu.memory_space<vmem>>, %arg3: memref<4x14x14xf32, #tpu.memory_space<vmem>>) attributes {dimension_semantics = [#tpu.dimension_semantics<parallel>], iteration_bounds = array<i64: 2>, scalar_prefetch = 0 : i64, scratch_operands = 0 : i64, tpu.core_type = #tpu.core_type<tc>, window_params = [{pipeline_mode = #tpu.pipeline_mode<synchronous>, transform_indices = @transform_0, window_bounds = array<i64: 16, 14>}, {transform_indices = @transform_1, window_bounds = array<i64: 4, 16, 16>}, {transform_indices = @transform_2, window_bounds = array<i64: 4, 14, 14>}]} {
    %c0 = arith.constant 0 : index
    %c0_0 = arith.constant 0 : index
    %0 = vector.load %arg1[%c0, %c0_0] : memref<16x14xf32, #tpu.memory_space<vmem>>, vector<16x14xf32>
    %c0_1 = arith.constant 0 : index
    %c0_2 = arith.constant 0 : index
    %c0_3 = arith.constant 0 : index
    %1 = vector.load %arg2[%c0_1, %c0_2, %c0_3] : memref<4x16x16xf32, #tpu.memory_space<vmem>>, vector<1x16x16xf32>
    %2 = vector.shape_cast %1 : vector<1x16x16xf32> to vector<16x16xf32>
    %3 = vector.extract_strided_slice %2 {offsets = [0, 0], sizes = [14, 16], strides = [1, 1]} : vector<16x16xf32> to vector<14x16xf32>
    %cst = arith.constant 0.319167763 : f32
    %4 = vector.broadcast %cst : f32 to vector<14x16xf32>
    %5 = arith.mulf %4, %3 : vector<14x16xf32>
    %6 = vector.extract_strided_slice %2 {offsets = [1, 0], sizes = [14, 16], strides = [1, 1]} : vector<16x16xf32> to vector<14x16xf32>
    %cst_4 = arith.constant 0.361664474 : f32
    %7 = vector.broadcast %cst_4 : f32 to vector<14x16xf32>
    %8 = arith.mulf %7, %6 : vector<14x16xf32>
    %9 = arith.addf %5, %8 : vector<14x16xf32>
    %10 = vector.extract_strided_slice %2 {offsets = [2, 0], sizes = [14, 16], strides = [1, 1]} : vector<16x16xf32> to vector<14x16xf32>
    %cst_5 = arith.constant 0.319167763 : f32
    %11 = vector.broadcast %cst_5 : f32 to vector<14x16xf32>
    %12 = arith.mulf %11, %10 : vector<14x16xf32>
    %13 = arith.addf %9, %12 : vector<14x16xf32>
    %cst_6 = arith.constant dense<0.000000e+00> : vector<14x14xf32>
    %14 = tpu.matmul %13, %0, %cst_6 {dimension_numbers = #tpu.dot_dimension_numbers<[1], [0], [0], [1], [0, 0, 1, 1], [], []>, precision = #tpu.contract_precision<fp32>} : vector<14x16xf32>, vector<16x14xf32>, vector<14x14xf32> -> vector<14x14xf32>
    %c0_7 = arith.constant 0 : index
    %c0_8 = arith.constant 0 : index
    %c0_9 = arith.constant 0 : index
    %15 = vector.load %arg3[%c0_7, %c0_8, %c0_9] : memref<4x14x14xf32, #tpu.memory_space<vmem>>, vector<1x14x14xf32>
    %16 = vector.shape_cast %15 : vector<1x14x14xf32> to vector<14x14xf32>
    %17 = vector.shape_cast %14 : vector<14x14xf32> to vector<1x14x14xf32>
    tpu.vector_store %arg3[%c0_7, %c0_8, %c0_9], %17 {strides = array<i32>} : memref<4x14x14xf32, #tpu.memory_space<vmem>>, vector<1x14x14xf32>,
    %c1 = arith.constant 1 : index
    %c0_10 = arith.constant 0 : index
    %c0_11 = arith.constant 0 : index
    %18 = vector.load %arg2[%c1, %c0_10, %c0_11] : memref<4x16x16xf32, #tpu.memory_space<vmem>>, vector<1x16x16xf32>
    %19 = vector.shape_cast %18 : vector<1x16x16xf32> to vector<16x16xf32>
    %20 = vector.extract_strided_slice %19 {offsets = [0, 0], sizes = [14, 16], strides = [1, 1]} : vector<16x16xf32> to vector<14x16xf32>
    %cst_12 = arith.constant 0.319167763 : f32
    %21 = vector.broadcast %cst_12 : f32 to vector<14x16xf32>
    %22 = arith.mulf %21, %20 : vector<14x16xf32>
    %23 = vector.extract_strided_slice %19 {offsets = [1, 0], sizes = [14, 16], strides = [1, 1]} : vector<16x16xf32> to vector<14x16xf32>
    %cst_13 = arith.constant 0.361664474 : f32
    %24 = vector.broadcast %cst_13 : f32 to vector<14x16xf32>
    %25 = arith.mulf %24, %23 : vector<14x16xf32>
    %26 = arith.addf %22, %25 : vector<14x16xf32>
    %27 = vector.extract_strided_slice %19 {offsets = [2, 0], sizes = [14, 16], strides = [1, 1]} : vector<16x16xf32> to vector<14x16xf32>
    %cst_14 = arith.constant 0.319167763 : f32
    %28 = vector.broadcast %cst_14 : f32 to vector<14x16xf32>
    %29 = arith.mulf %28, %27 : vector<14x16xf32>
    %30 = arith.addf %26, %29 : vector<14x16xf32>
    %cst_15 = arith.constant dense<0.000000e+00> : vector<14x14xf32>
    %31 = tpu.matmul %30, %0, %cst_15 {dimension_numbers = #tpu.dot_dimension_numbers<[1], [0], [0], [1], [0, 0, 1, 1], [], []>, precision = #tpu.contract_precision<fp32>} : vector<14x16xf32>, vector<16x14xf32>, vector<14x14xf32> -> vector<14x14xf32>
    %c1_16 = arith.constant 1 : index
    %c0_17 = arith.constant 0 : index
    %c0_18 = arith.constant 0 : index
    %32 = vector.load %arg3[%c1_16, %c0_17, %c0_18] : memref<4x14x14xf32, #tpu.memory_space<vmem>>, vector<1x14x14xf32>
    %33 = vector.shape_cast %32 : vector<1x14x14xf32> to vector<14x14xf32>
    %34 = vector.shape_cast %31 : vector<14x14xf32> to vector<1x14x14xf32>
    tpu.vector_store %arg3[%c1_16, %c0_17, %c0_18], %34 {strides = array<i32>} : memref<4x14x14xf32, #tpu.memory_space<vmem>>, vector<1x14x14xf32>,
    %c2 = arith.constant 2 : index
    %c0_19 = arith.constant 0 : index
    %c0_20 = arith.constant 0 : index
    %35 = vector.load %arg2[%c2, %c0_19, %c0_20] : memref<4x16x16xf32, #tpu.memory_space<vmem>>, vector<1x16x16xf32>
    %36 = vector.shape_cast %35 : vector<1x16x16xf32> to vector<16x16xf32>
    %37 = vector.extract_strided_slice %36 {offsets = [0, 0], sizes = [14, 16], strides = [1, 1]} : vector<16x16xf32> to vector<14x16xf32>
    %cst_21 = arith.constant 0.319167763 : f32
    %38 = vector.broadcast %cst_21 : f32 to vector<14x16xf32>
    %39 = arith.mulf %38, %37 : vector<14x16xf32>
    %40 = vector.extract_strided_slice %36 {offsets = [1, 0], sizes = [14, 16], strides = [1, 1]} : vector<16x16xf32> to vector<14x16xf32>
    %cst_22 = arith.constant 0.361664474 : f32
    %41 = vector.broadcast %cst_22 : f32 to vector<14x16xf32>
    %42 = arith.mulf %41, %40 : vector<14x16xf32>
    %43 = arith.addf %39, %42 : vector<14x16xf32>
    %44 = vector.extract_strided_slice %36 {offsets = [2, 0], sizes = [14, 16], strides = [1, 1]} : vector<16x16xf32> to vector<14x16xf32>
    %cst_23 = arith.constant 0.319167763 : f32
    %45 = vector.broadcast %cst_23 : f32 to vector<14x16xf32>
    %46 = arith.mulf %45, %44 : vector<14x16xf32>
    %47 = arith.addf %43, %46 : vector<14x16xf32>
    %cst_24 = arith.constant dense<0.000000e+00> : vector<14x14xf32>
    %48 = tpu.matmul %47, %0, %cst_24 {dimension_numbers = #tpu.dot_dimension_numbers<[1], [0], [0], [1], [0, 0, 1, 1], [], []>, precision = #tpu.contract_precision<fp32>} : vector<14x16xf32>, vector<16x14xf32>, vector<14x14xf32> -> vector<14x14xf32>
    %c2_25 = arith.constant 2 : index
    %c0_26 = arith.constant 0 : index
    %c0_27 = arith.constant 0 : index
    %49 = vector.load %arg3[%c2_25, %c0_26, %c0_27] : memref<4x14x14xf32, #tpu.memory_space<vmem>>, vector<1x14x14xf32>
    %50 = vector.shape_cast %49 : vector<1x14x14xf32> to vector<14x14xf32>
    %51 = vector.shape_cast %48 : vector<14x14xf32> to vector<1x14x14xf32>
    tpu.vector_store %arg3[%c2_25, %c0_26, %c0_27], %51 {strides = array<i32>} : memref<4x14x14xf32, #tpu.memory_space<vmem>>, vector<1x14x14xf32>,
    %c3 = arith.constant 3 : index
    %c0_28 = arith.constant 0 : index
    %c0_29 = arith.constant 0 : index
    %52 = vector.load %arg2[%c3, %c0_28, %c0_29] : memref<4x16x16xf32, #tpu.memory_space<vmem>>, vector<1x16x16xf32>
    %53 = vector.shape_cast %52 : vector<1x16x16xf32> to vector<16x16xf32>
    %54 = vector.extract_strided_slice %53 {offsets = [0, 0], sizes = [14, 16], strides = [1, 1]} : vector<16x16xf32> to vector<14x16xf32>
    %cst_30 = arith.constant 0.319167763 : f32
    %55 = vector.broadcast %cst_30 : f32 to vector<14x16xf32>
    %56 = arith.mulf %55, %54 : vector<14x16xf32>
    %57 = vector.extract_strided_slice %53 {offsets = [1, 0], sizes = [14, 16], strides = [1, 1]} : vector<16x16xf32> to vector<14x16xf32>
    %cst_31 = arith.constant 0.361664474 : f32
    %58 = vector.broadcast %cst_31 : f32 to vector<14x16xf32>
    %59 = arith.mulf %58, %57 : vector<14x16xf32>
    %60 = arith.addf %56, %59 : vector<14x16xf32>
    %61 = vector.extract_strided_slice %53 {offsets = [2, 0], sizes = [14, 16], strides = [1, 1]} : vector<16x16xf32> to vector<14x16xf32>
    %cst_32 = arith.constant 0.319167763 : f32
    %62 = vector.broadcast %cst_32 : f32 to vector<14x16xf32>
    %63 = arith.mulf %62, %61 : vector<14x16xf32>
    %64 = arith.addf %60, %63 : vector<14x16xf32>
    %cst_33 = arith.constant dense<0.000000e+00> : vector<14x14xf32>
    %65 = tpu.matmul %64, %0, %cst_33 {dimension_numbers = #tpu.dot_dimension_numbers<[1], [0], [0], [1], [0, 0, 1, 1], [], []>, precision = #tpu.contract_precision<fp32>} : vector<14x16xf32>, vector<16x14xf32>, vector<14x14xf32> -> vector<14x14xf32>
    %c3_34 = arith.constant 3 : index
    %c0_35 = arith.constant 0 : index
    %c0_36 = arith.constant 0 : index
    %66 = vector.load %arg3[%c3_34, %c0_35, %c0_36] : memref<4x14x14xf32, #tpu.memory_space<vmem>>, vector<1x14x14xf32>
    %67 = vector.shape_cast %66 : vector<1x14x14xf32> to vector<14x14xf32>
    %68 = vector.shape_cast %65 : vector<14x14xf32> to vector<1x14x14xf32>
    tpu.vector_store %arg3[%c3_34, %c0_35, %c0_36], %68 {strides = array<i32>} : memref<4x14x14xf32, #tpu.memory_space<vmem>>, vector<1x14x14xf32>,
    return
  }
  func.func @transform_0(%arg0: i32) -> (i32, i32) {
    %c0_i32 = arith.constant 0 : i32
    %c0_i32_0 = arith.constant 0 : i32
    %c0_i32_1 = arith.constant 0 : i32
    return %c0_i32, %c0_i32_0 : i32, i32
  }
  func.func @transform_1(%arg0: i32) -> (i32, i32, i32) {
    %c0_i32 = arith.constant 0 : i32
    %c0_i32_0 = arith.constant 0 : i32
    %c0_i32_1 = arith.constant 0 : i32
    return %arg0, %c0_i32, %c0_i32_0 : i32, i32, i32
  }
  func.func @transform_2(%arg0: i32) -> (i32, i32, i32) {
    %c0_i32 = arith.constant 0 : i32
    %c0_i32_0 = arith.constant 0 : i32
    %c0_i32_1 = arith.constant 0 : i32
    return %arg0, %c0_i32, %c0_i32_0 : i32, i32, i32
  }
}

</mosaic_0001>

<llo_original>
// kernel: tpu_custom_call.1
$region0: #{tpu_custom_call.1}
  #allocation0 [shape = 'u32[]', space=smem, size = 0x4, offset = 0x4, fixed_abs, tag = 'smem constant byte address 0x4 - core index']
  #allocation1 [shape = 'u32[144,128]{1,0:T(1,128)}', space=vmem, size = 0x12000, scoped, tag = 'internal scratch']
  %s0 = inlined_call_operand.hbm [shape: f32[16,14], index: 0, kind: input, shape index: {}]
  %s1 = inlined_call_operand.hbm [shape: f32[8,16,16], index: 1, kind: input, shape index: {}]
  %s2 = inlined_call_operand.vmem [shape: f32[8,14,14], index: 2, kind: output, shape index: {}]
  %s3 = sld [smem:[#allocation0]]
  $region49: #{tpu_custom_call.1} parent=0
    _
  %s5 = ssub.s32 1, %s3
  %s6 = scalar_select 0, %s5, %s3
  $region1: #{tpu_custom_call.1} parent=0
    #allocation2 [shape = 'u8[8192]{0}', space=vmem, size = 0x2000, scoped, tag = 'input window, operand 0, single buffered']
    #allocation3 [shape = 's32[2]{0}', space=sflag, size = 0x8, scoped, tag = 'scoped memory for tpu_custom_call.1']
    #allocation4 [shape = 'u8[65536]{0}', space=vmem, size = 0x10000, scoped, tag = 'input window, operand 1']
    #allocation5 [shape = 's32[2]{0}', space=sflag, size = 0x8, scoped, tag = 'scoped memory for tpu_custom_call.1']
    %7 = vsyncpa [#allocation3], 0
    %8 = vsyncpa [#allocation5], 0
    %s9 = scalar_lea.sflag [#allocation5], 1
    %10 = vsyncpa %s9, 0
    loop: start=0, step=1, limit=4
    $region2: #{tpu_custom_call.1} parent=1 // loop_pre_header
      _
    $region3: #{tpu_custom_call.1} parent=1 // loop_header
      %s12 = sphi 0, %s16
      %p13 = scmp.ge.s32.totalorder %s12, 4
      %s20 = sphi 0, %s20
      %s22 = sphi 0, %s20
      %s23 = sphi 0, %s22
      %s37 = sphi 0, %s23
      %s43 = sphi 0, %s45
      %s46 = sphi 0, %s43
      %s47 = sphi 0, %s46
      %s63 = sphi 0, %s47
      %s69 = sphi 0, %s71
      %s72 = sphi 0, %s69
      %s73 = sphi 0, %s72
      %s89 = sphi 0, %s73
    $region4: #{tpu_custom_call.1} parent=1 // loop_header_branch
      %15 = sbr.rel (%p13) target = $region8
    $region5: #{tpu_custom_call.1} parent=1 // loop_body
      %s17 = ssub.s32 %s12, 1
      %s18 = ssub.s32 %s12, 2
      %s19 = sadd.s32 %s12, 1
      %s21 = sadd.s32 %s20, 1
      %p24 = scmp.eq.s32.totalorder %s12, 1
      %p25 = scmp.ne.s32.totalorder %s20, %s22
      %p26 = scmp.eq.s32.totalorder %s12, 0
      %p27 = por %p25, %p26
      %p28 = scmp.ne.s32.totalorder %s20, %s22
      %p29 = scmp.eq.s32.totalorder %s17, 1
      %p30 = por %p28, %p29
      %p31 = scmp.ne.s32.totalorder %s22, %s23
      %p32 = scmp.eq.s32.totalorder %s17, 0
      %p33 = por %p31, %p32
      %p34 = scmp.ne.s32.totalorder %s22, %s23
      %p35 = scmp.eq.s32.totalorder %s18, 1
      %p36 = por %p34, %p35
      %p38 = scmp.ne.s32.totalorder %s23, %s37
      %p39 = scmp.eq.s32.totalorder %s18, 0
      %p40 = por %p38, %p39
      %s41 = ssub.s32 %s12, %s19
      %p42 = scmp.eq.s32.totalorder %s41, 0
      %s44 = sadd.s32 %s43, 1
      %s45 = scalar_select %p42, %s43, %s44
      %p48 = pneg %p42
      %p49 = scmp.eq.s32.totalorder %s12, 1
      %p50 = por %p48, %p49
      %p51 = scmp.ne.s32.totalorder %s43, %s46
      %p52 = scmp.eq.s32.totalorder %s12, 0
      %p53 = por %p51, %p52
      %p54 = scmp.ne.s32.totalorder %s43, %s46
      %p55 = scmp.eq.s32.totalorder %s17, 1
      %p56 = por %p54, %p55
      %p57 = scmp.ne.s32.totalorder %s46, %s47
      %p58 = scmp.eq.s32.totalorder %s17, 0
      %p59 = por %p57, %p58
      %p60 = scmp.ne.s32.totalorder %s46, %s47
      %p61 = scmp.eq.s32.totalorder %s18, 1
      %p62 = por %p60, %p61
      %p64 = scmp.ne.s32.totalorder %s47, %s63
      %p65 = scmp.eq.s32.totalorder %s18, 0
      %p66 = por %p64, %p65
      %s67 = ssub.s32 %s12, %s19
      %p68 = scmp.eq.s32.totalorder %s67, 0
      %s70 = sadd.s32 %s69, 1
      %s71 = scalar_select %p68, %s69, %s70
      %p74 = pneg %p68
      %p75 = scmp.eq.s32.totalorder %s12, 1
      %p76 = por %p74, %p75
      %p77 = scmp.ne.s32.totalorder %s69, %s72
      %p78 = scmp.eq.s32.totalorder %s12, 0
      %p79 = por %p77, %p78
      %p80 = scmp.ne.s32.totalorder %s69, %s72
      %p81 = scmp.eq.s32.totalorder %s17, 1
      %p82 = por %p80, %p81
      %p83 = scmp.ne.s32.totalorder %s72, %s73
      %p84 = scmp.eq.s32.totalorder %s17, 0
      %p85 = por %p83, %p84
      %p86 = scmp.ne.s32.totalorder %s72, %s73
      %p87 = scmp.eq.s32.totalorder %s18, 1
      %p88 = por %p86, %p87
      %p90 = scmp.ne.s32.totalorder %s73, %s89
      %p91 = scmp.eq.s32.totalorder %s18, 0
      %p92 = por %p90, %p91
      %p93 = scmp.le.s32.totalorder 1, %s12
      %p94 = scmp.lt.s32.totalorder %s12, 3
      %p95 = pnand %p93, %p94
      %p96 = pneg %p95
      // Predicated region
      $region9: #{tpu_custom_call.1} parent=5 // pred_check
        _
      $region10: #{tpu_custom_call.1} parent=5 // pred_check_branch
        %98 = sbr.rel (%p95) target = $region12
      $region11: #{tpu_custom_call.1} parent=5 // pred_region
        %s99 = ssub.s32 %s12, 1
        // Predicated region
        $region13: #{tpu_custom_call.1} parent=11 // pred_check
          %p100 = pneg %p33
        $region14: #{tpu_custom_call.1} parent=11 // pred_check_branch
          %102 = sbr.rel (%p100) target = $region16
        $region15: #{tpu_custom_call.1} parent=11 // pred_region
          %s104 = ssub.s32 256, 256
          %105 = vsyncadd [#allocation3], %s104
          %s106 = sshll.u32 [#allocation2], 4
          %s107 = int_to_ptr.vmem [resolvable:$true] %s106
          %112 = dma.hbm_to_vmem [thread:$0]  %s0, 256, %s107, [#allocation3], 128, 128, 8
        $region16: #{tpu_custom_call.1} parent=11 // pred_fallthru
          _
      $region12: #{tpu_custom_call.1} parent=5 // pred_fallthru
        _
      %p113 = scmp.lt.s32.totalorder %s12, 2
      // Predicated region
      $region17: #{tpu_custom_call.1} parent=5 // pred_check
        %p114 = pneg %p113
      $region18: #{tpu_custom_call.1} parent=5 // pred_check_branch
        %116 = sbr.rel (%p114) target = $region20
      $region19: #{tpu_custom_call.1} parent=5 // pred_region
        // Predicated region
        $region21: #{tpu_custom_call.1} parent=19 // pred_check
          %p117 = pneg %p53
        $region22: #{tpu_custom_call.1} parent=19 // pred_check_branch
          %119 = sbr.rel (%p117) target = $region24
        $region23: #{tpu_custom_call.1} parent=19 // pred_region
          %s120 = sand.u32 %s43, 1
          %s121 = scalar_lea.sflag [#allocation5], %s120
          %s122 = sand.u32 %s43, 1
          %s123 = smul.addr %s122, 64
          %s124 = scalar_lea.vmem [#allocation4], %s123
          %s125 = smul.u32 4, %s12
          %s127 = ssub.s32 1024, 1024
          %128 = vsyncadd %s121, %s127
          %s129 = smul.addr %s125, 2
          %s130 = smul.addr %s129, 128
          %s131 = scalar_lea.hbm %s1, %s130
          %s132 = sshll.u32 %s124, 4
          %s133 = int_to_ptr.vmem [resolvable:$true] %s132
          %138 = dma.hbm_to_vmem [thread:$0]  %s131, 1024, %s133, %s121, 128, 128, 8
        $region24: #{tpu_custom_call.1} parent=19 // pred_fallthru
          _
      $region20: #{tpu_custom_call.1} parent=5 // pred_fallthru
        _
      %p139 = scmp.le.s32.totalorder 1, %s12
      %p140 = scmp.lt.s32.totalorder %s12, 3
      %p141 = pnand %p139, %p140
      %p142 = pneg %p141
      // Predicated region
      $region25: #{tpu_custom_call.1} parent=5 // pred_check
        _
      $region26: #{tpu_custom_call.1} parent=5 // pred_check_branch
        %144 = sbr.rel (%p141) target = $region28
      $region27: #{tpu_custom_call.1} parent=5 // pred_region
        %s145 = ssub.s32 %s12, 1
        // Predicated region
        $region29: #{tpu_custom_call.1} parent=27 // pred_check
          %p146 = pneg %p33
        $region30: #{tpu_custom_call.1} parent=27 // pred_check_branch
          %148 = sbr.rel (%p146) target = $region32
        $region31: #{tpu_custom_call.1} parent=27 // pred_region
          %149 = dma.done [#allocation3], 256
        $region32: #{tpu_custom_call.1} parent=27 // pred_fallthru
          _
        %s150 = sand.u32 %s46, 1
        %s151 = scalar_lea.sflag [#allocation5], %s150
        %s152 = sand.u32 %s46, 1
        %s153 = smul.addr %s152, 64
        %s154 = scalar_lea.vmem [#allocation4], %s153
        // Predicated region
        $region33: #{tpu_custom_call.1} parent=27 // pred_check
          %p155 = pneg %p59
        $region34: #{tpu_custom_call.1} parent=27 // pred_check_branch
          %157 = sbr.rel (%p155) target = $region36
        $region35: #{tpu_custom_call.1} parent=27 // pred_region
          %158 = dma.done %s151, 1024
        $region36: #{tpu_custom_call.1} parent=27 // pred_fallthru
          _
        %p159 = pneg %p33
        %p160 = pneg %p30
        %s161 = sand.u32 %s46, 1
        %s162 = scalar_lea.sflag [#allocation5], %s161
        %s163 = sand.u32 %s46, 1
        %s164 = smul.addr %s163, 64
        %s165 = scalar_lea.vmem [#allocation4], %s164
        %p166 = pneg %p59
        %p167 = pneg %p56
        %p168 = pneg %p85
        %p169 = pneg %p82
        %s170 = smul.u32 4, %s17
        %p171 = scmp.lt.s32.totalorder %s170, 7
        %s172 = scalar_select %p171, %s170, 7
        %s173 = smul.addr %s172, 2
        %s174 = smul.addr %s173, 8
        %s175 = scalar_lea.vmem %s2, %s174
        %s176 = smul.u32 4, %s17
        %s177 = smul.u32 4, %s17
        %p178 = scmp.lt.s32.totalorder %s177, 7
        %s179 = scalar_select %p178, %s177, 7
        %s180 = smul.addr %s179, 2
        %s181 = smul.addr %s180, 8
        %s182 = scalar_lea.vmem %s2, %s181
        %s183 = smul.u32 4, %s17
        %v184 = vld [vmem:[#allocation2] sm:$0xff]
        %v185 = vld [vmem:[#allocation2 + $0x8] sm:$0xff]
        %v186 = vld [vmem:[%s154] sm:$0xff]
        %v187 = vld [vmem:[%s154 + $0x8] sm:$0xff]
        %v188 = vmul.f32 %v186, 0.31916776
        %v189 = vmul.f32 %v187, 0.31916776
        %v190 = vmul.f32 %v186, 0.36166447
        %v191 = vmul.f32 %v187, 0.36166447
        %vm194 = vcmask 1046528
        %v195 = vrot.slane %v190, 1
        %v196 = vrot.slane %v191, 1
        %v197 = vsel %vm194, %v195, %v196
        %v200 = vadd.f32 %v188, %v197
        %v201 = vadd.f32 %v189, %v196
        %vm204 = vcmask 1045504
        %v205 = vrot.slane %v188, 2
        %v206 = vrot.slane %v189, 2
        %v207 = vsel %vm204, %v205, %v206
        %v210 = vadd.f32 %v200, %v207
        %v211 = vadd.f32 %v201, %v206
        %vm212 = vcmask 130048
        %v214 = vsel %vm212, %v210, 0
        %v217 = vsel %vm212, %v211, 0
        %219 = vmatprep.subr.mxu0 0.0
        %v220 = vand.u32 %v184, 4294901760
        %221 = vmatpush1.msra.mxu0 %v220
        %222 = vmatprep.subr.mxu0 0.0
        %v223 = vand.u32 %v185, 4294901760
        %224 = vmatpush1.msra.mxu0 %v223
        %225 = vmatprep.subr.mxu0 0.0
        %226 = vmatpush1.msra.mxu0 0.0
        %227 = vmatprep.subr.mxu0 0.0
        %228 = vmatpush1.msra.mxu0 0.0
        %229 = vmatprep.subr.mxu0 0.0
        %230 = vmatpush1.msra.mxu0 0.0
        %231 = vmatprep.subr.mxu0 0.0
        %232 = vmatpush1.msra.mxu0 0.0
        %233 = vmatprep.subr.mxu0 0.0
        %234 = vmatpush1.msra.mxu0 0.0
        %235 = vmatprep.subr.mxu0 0.0
        %236 = vmatpush1.msra.mxu0 0.0
        %237 = vmatprep.subr.mxu0 0.0
        %238 = vmatpush1.msra.mxu0 0.0
        %239 = vmatprep.subr.mxu0 0.0
        %240 = vmatpush1.msra.mxu0 0.0
        %241 = vmatprep.subr.mxu0 0.0
        %242 = vmatpush1.msra.mxu0 0.0
        %243 = vmatprep.subr.mxu0 0.0
        %244 = vmatpush1.msra.mxu0 0.0
        %245 = vmatprep.subr.mxu0 0.0
        %246 = vmatpush1.msra.mxu0 0.0
        %247 = vmatprep.subr.mxu0 0.0
        %248 = vmatpush1.msra.mxu0 0.0
        %249 = vmatprep.subr.mxu0 0.0
        %250 = vmatpush1.msra.mxu0 0.0
        %251 = vmatprep.subr.mxu0 0.0
        %252 = vmatpush1.msra.mxu0 0.0
        %253 = vmatprep.subr.mxu0 0.0
        %254 = vmatpush1.msra.mxu0 0.0
        %255 = vmatprep.subr.mxu0 0.0
        %256 = vmatpush1.msra.mxu0 0.0
        %257 = vmatprep.subr.mxu0 0.0
        %258 = vmatpush1.msra.mxu0 0.0
        %259 = vmatprep.subr.mxu0 0.0
        %260 = vmatpush1.msra.mxu0 0.0
        %261 = vmatprep.subr.mxu0 0.0
        %262 = vmatpush1.msra.mxu0 0.0
        %263 = vmatprep.subr.mxu0 0.0
        %264 = vmatpush1.msra.mxu0 0.0
        %265 = vmatprep.subr.mxu0 0.0
        %266 = vmatpush1.msra.mxu0 0.0
        %267 = vmatprep.subr.mxu0 0.0
        %268 = vmatpush1.msra.mxu0 0.0
        %269 = vmatprep.subr.mxu0 0.0
        %270 = vmatpush1.msra.mxu0 0.0
        %271 = vmatprep.subr.mxu0 0.0
        %272 = vmatpush1.msra.mxu0 0.0
        %273 = vmatprep.subr.mxu0 0.0
        %274 = vmatpush1.msra.mxu0 0.0
        %275 = vmatprep.subr.mxu0 0.0
        %276 = vmatpush1.msra.mxu0 0.0
        %277 = vmatprep.subr.mxu0 0.0
        %278 = vmatpush1.msra.mxu0 0.0
        %279 = vmatprep.subr.mxu0 0.0
        %280 = vmatpush1.msra.mxu0 0.0
        %281 = vmatprep.subr.mxu0 0.0
        %282 = vmatpush1.msra.mxu0 0.0
        %283 = vmatprep.subr.mxu0 0.0
        %284 = vmatpush1.msra.mxu0 0.0
        %285 = vmatprep.mubr.f32.mxu0 0.0
        %v286 = vand.u32 %v214, 4294901760
        %v287 = vsub.f32 %v214, %v286
        %v288 = vand.u32 %v287, 4294901760
        %v289 = vsub.f32 %v287, %v288
        %v290 = vand.u32 %v289, 4294901760
        %291 = vmatmul.mubr.f32.gmra.mrb[0].mxu0 %v290
        %v292 = vpop.f32.mrb[0].mxu0
        %v293 = vadd.f32 0.0, %v292
        %v294 = vpop.f32.mrb[0].mxu0
        %295 = vmatprep.mubr.f32.mxu0 0.0
        %v296 = vand.u32 %v217, 4294901760
        %v297 = vsub.f32 %v217, %v296
        %v298 = vand.u32 %v297, 4294901760
        %v299 = vsub.f32 %v297, %v298
        %v300 = vand.u32 %v299, 4294901760
        %301 = vmatmul.mubr.f32.gmra.mrb[0].mxu0 %v300
        %v302 = vpop.f32.mrb[0].mxu0
        %v303 = vadd.f32 0.0, %v302
        %v304 = vpop.f32.mrb[0].mxu0
        %305 = vdwg.mxu0
        %306 = vmatprep.subr.mxu0 0.0
        %v307 = vand.u32 %v184, 4294901760
        %v308 = vsub.f32 %v184, %v307
        %v309 = vand.u32 %v308, 4294901760
        %v310 = vsub.f32 %v308, %v309
        %v311 = vand.u32 %v310, 4294901760
        %312 = vmatpush1.msra.mxu0 %v311
        %313 = vmatprep.subr.mxu0 0.0
        %v314 = vand.u32 %v185, 4294901760
        %v315 = vsub.f32 %v185, %v314
        %v316 = vand.u32 %v315, 4294901760
        %v317 = vsub.f32 %v315, %v316
        %v318 = vand.u32 %v317, 4294901760
        %319 = vmatpush1.msra.mxu0 %v318
        %320 = vmatprep.subr.mxu0 0.0
        %321 = vmatpush1.msra.mxu0 0.0
        %322 = vmatprep.subr.mxu0 0.0
        %323 = vmatpush1.msra.mxu0 0.0
        %324 = vmatprep.subr.mxu0 0.0
        %325 = vmatpush1.msra.mxu0 0.0
        %326 = vmatprep.subr.mxu0 0.0
        %327 = vmatpush1.msra.mxu0 0.0
        %328 = vmatprep.subr.mxu0 0.0
        %329 = vmatpush1.msra.mxu0 0.0
        %330 = vmatprep.subr.mxu0 0.0
        %331 = vmatpush1.msra.mxu0 0.0
        %332 = vmatprep.subr.mxu0 0.0
        %333 = vmatpush1.msra.mxu0 0.0
        %334 = vmatprep.subr.mxu0 0.0
        %335 = vmatpush1.msra.mxu0 0.0
        %336 = vmatprep.subr.mxu0 0.0
        %337 = vmatpush1.msra.mxu0 0.0
        %338 = vmatprep.subr.mxu0 0.0
        %339 = vmatpush1.msra.mxu0 0.0
        %340 = vmatprep.subr.mxu0 0.0
        %341 = vmatpush1.msra.mxu0 0.0
        %342 = vmatprep.subr.mxu0 0.0
        %343 = vmatpush1.msra.mxu0 0.0
        %344 = vmatprep.subr.mxu0 0.0
        %345 = vmatpush1.msra.mxu0 0.0
        %346 = vmatprep.subr.mxu0 0.0
        %347 = vmatpush1.msra.mxu0 0.0
        %348 = vmatprep.subr.mxu0 0.0
        %349 = vmatpush1.msra.mxu0 0.0
        %350 = vmatprep.subr.mxu0 0.0
        %351 = vmatpush1.msra.mxu0 0.0
        %352 = vmatprep.subr.mxu0 0.0
        %353 = vmatpush1.msra.mxu0 0.0
        %354 = vmatprep.subr.mxu0 0.0
        %355 = vmatpush1.msra.mxu0 0.0
        %356 = vmatprep.subr.mxu0 0.0
        %357 = vmatpush1.msra.mxu0 0.0
        %358 = vmatprep.subr.mxu0 0.0
        %359 = vmatpush1.msra.mxu0 0.0
        %360 = vmatprep.subr.mxu0 0.0
        %361 = vmatpush1.msra.mxu0 0.0
        %362 = vmatprep.subr.mxu0 0.0
        %363 = vmatpush1.msra.mxu0 0.0
        %364 = vmatprep.subr.mxu0 0.0
        %365 = vmatpush1.msra.mxu0 0.0
        %366 = vmatprep.subr.mxu0 0.0
        %367 = vmatpush1.msra.mxu0 0.0
        %368 = vmatprep.subr.mxu0 0.0
        %369 = vmatpush1.msra.mxu0 0.0
        %370 = vmatprep.subr.mxu0 0.0
        %371 = vmatpush1.msra.mxu0 0.0
        %372 = vmatprep.subr.mxu0 0.0
        %373 = vmatpush1.msra.mxu0 0.0
        %374 = vmatprep.subr.mxu0 0.0
        %375 = vmatpush1.msra.mxu0 0.0
        %376 = vmatprep.subr.mxu0 0.0
        %377 = vmatpush1.msra.mxu0 0.0
        %378 = vmatprep.subr.mxu0 0.0
        %379 = vmatpush1.msra.mxu0 0.0
        %380 = vmatprep.mubr.f32.mxu0 0.0
        %v381 = vand.u32 %v214, 4294901760
        %382 = vmatmul.mubr.f32.gmra.mrb[0].mxu0 %v381
        %v383 = vpop.f32.mrb[0].mxu0
        %v384 = vadd.f32 %v293, %v383
        %v385 = vpop.f32.mrb[0].mxu0
        %386 = vmatprep.mubr.f32.mxu0 0.0
        %v387 = vand.u32 %v217, 4294901760
        %388 = vmatmul.mubr.f32.gmra.mrb[0].mxu0 %v387
        %v389 = vpop.f32.mrb[0].mxu0
        %v390 = vadd.f32 %v303, %v389
        %v391 = vpop.f32.mrb[0].mxu0
        %392 = vdwg.mxu0
        %393 = vmatprep.subr.mxu0 0.0
        %v394 = vand.u32 %v184, 4294901760
        %v395 = vsub.f32 %v184, %v394
        %396 = vmatpush1.msra.mxu0 %v395
        %397 = vmatprep.subr.mxu0 0.0
        %v398 = vand.u32 %v185, 4294901760
        %v399 = vsub.f32 %v185, %v398
        %400 = vmatpush1.msra.mxu0 %v399
        %401 = vmatprep.subr.mxu0 0.0
        %402 = vmatpush1.msra.mxu0 0.0
        %403 = vmatprep.subr.mxu0 0.0
        %404 = vmatpush1.msra.mxu0 0.0
        %405 = vmatprep.subr.mxu0 0.0
        %406 = vmatpush1.msra.mxu0 0.0
        %407 = vmatprep.subr.mxu0 0.0
        %408 = vmatpush1.msra.mxu0 0.0
        %409 = vmatprep.subr.mxu0 0.0
        %410 = vmatpush1.msra.mxu0 0.0
        %411 = vmatprep.subr.mxu0 0.0
        %412 = vmatpush1.msra.mxu0 0.0
        %413 = vmatprep.subr.mxu0 0.0
        %414 = vmatpush1.msra.mxu0 0.0
        %415 = vmatprep.subr.mxu0 0.0
        %416 = vmatpush1.msra.mxu0 0.0
        %417 = vmatprep.subr.mxu0 0.0
        %418 = vmatpush1.msra.mxu0 0.0
        %419 = vmatprep.subr.mxu0 0.0
        %420 = vmatpush1.msra.mxu0 0.0
        %421 = vmatprep.subr.mxu0 0.0
        %422 = vmatpush1.msra.mxu0 0.0
        %423 = vmatprep.subr.mxu0 0.0
        %424 = vmatpush1.msra.mxu0 0.0
        %425 = vmatprep.subr.mxu0 0.0
        %426 = vmatpush1.msra.mxu0 0.0
        %427 = vmatprep.subr.mxu0 0.0
        %428 = vmatpush1.msra.mxu0 0.0
        %429 = vmatprep.subr.mxu0 0.0
        %430 = vmatpush1.msra.mxu0 0.0
        %431 = vmatprep.subr.mxu0 0.0
        %432 = vmatpush1.msra.mxu0 0.0
        %433 = vmatprep.subr.mxu0 0.0
        %434 = vmatpush1.msra.mxu0 0.0
        %435 = vmatprep.subr.mxu0 0.0
        %436 = vmatpush1.msra.mxu0 0.0
        %437 = vmatprep.subr.mxu0 0.0
        %438 = vmatpush1.msra.mxu0 0.0
        %439 = vmatprep.subr.mxu0 0.0
        %440 = vmatpush1.msra.mxu0 0.0
        %441 = vmatprep.subr.mxu0 0.0
        %442 = vmatpush1.msra.mxu0 0.0
        %443 = vmatprep.subr.mxu0 0.0
        %444 = vmatpush1.msra.mxu0 0.0
        %445 = vmatprep.subr.mxu0 0.0
        %446 = vmatpush1.msra.mxu0 0.0
        %447 = vmatprep.subr.mxu0 0.0
        %448 = vmatpush1.msra.mxu0 0.0
        %449 = vmatprep.subr.mxu0 0.0
        %450 = vmatpush1.msra.mxu0 0.0
        %451 = vmatprep.subr.mxu0 0.0
        %452 = vmatpush1.msra.mxu0 0.0
        %453 = vmatprep.subr.mxu0 0.0
        %454 = vmatpush1.msra.mxu0 0.0
        %455 = vmatprep.subr.mxu0 0.0
        %456 = vmatpush1.msra.mxu0 0.0
        %457 = vmatprep.subr.mxu0 0.0
        %458 = vmatpush1.msra.mxu0 0.0
        %459 = vmatprep.subr.mxu0 0.0
        %460 = vmatpush1.msra.mxu0 0.0
        %461 = vmatprep.mubr.f32.mxu0 0.0
        %v462 = vand.u32 %v214, 4294901760
        %v463 = vsub.f32 %v214, %v462
        %464 = vmatmul.mubr.f32.gmra.mrb[0].mxu0 %v463
        %v465 = vpop.f32.mrb[0].mxu0
        %v466 = vadd.f32 %v384, %v465
        %v467 = vpop.f32.mrb[0].mxu0
        %468 = vmatprep.mubr.f32.mxu0 0.0
        %v469 = vand.u32 %v217, 4294901760
        %v470 = vsub.f32 %v217, %v469
        %471 = vmatmul.mubr.f32.gmra.mrb[0].mxu0 %v470
        %v472 = vpop.f32.mrb[0].mxu0
        %v473 = vadd.f32 %v390, %v472
        %v474 = vpop.f32.mrb[0].mxu0
        %475 = vdwg.mxu0
        %476 = vmatprep.subr.mxu0 0.0
        %v477 = vand.u32 %v184, 4294901760
        %478 = vmatpush1.msra.mxu0 %v477
        %479 = vmatprep.subr.mxu0 0.0
        %v480 = vand.u32 %v185, 4294901760
        %481 = vmatpush1.msra.mxu0 %v480
        %482 = vmatprep.subr.mxu0 0.0
        %483 = vmatpush1.msra.mxu0 0.0
        %484 = vmatprep.subr.mxu0 0.0
        %485 = vmatpush1.msra.mxu0 0.0
        %486 = vmatprep.subr.mxu0 0.0
        %487 = vmatpush1.msra.mxu0 0.0
        %488 = vmatprep.subr.mxu0 0.0
        %489 = vmatpush1.msra.mxu0 0.0
        %490 = vmatprep.subr.mxu0 0.0
        %491 = vmatpush1.msra.mxu0 0.0
        %492 = vmatprep.subr.mxu0 0.0
        %493 = vmatpush1.msra.mxu0 0.0
        %494 = vmatprep.subr.mxu0 0.0
        %495 = vmatpush1.msra.mxu0 0.0
        %496 = vmatprep.subr.mxu0 0.0
        %497 = vmatpush1.msra.mxu0 0.0
        %498 = vmatprep.subr.mxu0 0.0
        %499 = vmatpush1.msra.mxu0 0.0
        %500 = vmatprep.subr.mxu0 0.0
        %501 = vmatpush1.msra.mxu0 0.0
        %502 = vmatprep.subr.mxu0 0.0
        %503 = vmatpush1.msra.mxu0 0.0
        %504 = vmatprep.subr.mxu0 0.0
        %505 = vmatpush1.msra.mxu0 0.0
        %506 = vmatprep.subr.mxu0 0.0
        %507 = vmatpush1.msra.mxu0 0.0
        %508 = vmatprep.subr.mxu0 0.0
        %509 = vmatpush1.msra.mxu0 0.0
        %510 = vmatprep.subr.mxu0 0.0
        %511 = vmatpush1.msra.mxu0 0.0
        %512 = vmatprep.subr.mxu0 0.0
        %513 = vmatpush1.msra.mxu0 0.0
        %514 = vmatprep.subr.mxu0 0.0
        %515 = vmatpush1.msra.mxu0 0.0
        %516 = vmatprep.subr.mxu0 0.0
        %517 = vmatpush1.msra.mxu0 0.0
        %518 = vmatprep.subr.mxu0 0.0
        %519 = vmatpush1.msra.mxu0 0.0
        %520 = vmatprep.subr.mxu0 0.0
        %521 = vmatpush1.msra.mxu0 0.0
        %522 = vmatprep.subr.mxu0 0.0
        %523 = vmatpush1.msra.mxu0 0.0
        %524 = vmatprep.subr.mxu0 0.0
        %525 = vmatpush1.msra.mxu0 0.0
        %526 = vmatprep.subr.mxu0 0.0
        %527 = vmatpush1.msra.mxu0 0.0
        %528 = vmatprep.subr.mxu0 0.0
        %529 = vmatpush1.msra.mxu0 0.0
        %530 = vmatprep.subr.mxu0 0.0
        %531 = vmatpush1.msra.mxu0 0.0
        %532 = vmatprep.subr.mxu0 0.0
        %533 = vmatpush1.msra.mxu0 0.0
        %534 = vmatprep.subr.mxu0 0.0
        %535 = vmatpush1.msra.mxu0 0.0
        %536 = vmatprep.subr.mxu0 0.0
        %537 = vmatpush1.msra.mxu0 0.0
        %538 = vmatprep.subr.mxu0 0.0
        %539 = vmatpush1.msra.mxu0 0.0
        %540 = vmatprep.subr.mxu0 0.0
        %541 = vmatpush1.msra.mxu0 0.0
        %542 = vmatprep.mubr.f32.mxu0 0.0
        %v543 = vand.u32 %v214, 4294901760
        %v544 = vsub.f32 %v214, %v543
        %v545 = vand.u32 %v544, 4294901760
        %546 = vmatmul.mubr.f32.gmra.mrb[0].mxu0 %v545
        %v547 = vpop.f32.mrb[0].mxu0
        %v548 = vadd.f32 %v466, %v547
        %v549 = vpop.f32.mrb[0].mxu0
        %550 = vmatprep.mubr.f32.mxu0 0.0
        %v551 = vand.u32 %v217, 4294901760
        %v552 = vsub.f32 %v217, %v551
        %v553 = vand.u32 %v552, 4294901760
        %554 = vmatmul.mubr.f32.gmra.mrb[0].mxu0 %v553
        %v555 = vpop.f32.mrb[0].mxu0
        %v556 = vadd.f32 %v473, %v555
        %v557 = vpop.f32.mrb[0].mxu0
        %558 = vdwg.mxu0
        %559 = vmatprep.subr.mxu0 0.0
        %v560 = vand.u32 %v184, 4294901760
        %v561 = vsub.f32 %v184, %v560
        %v562 = vand.u32 %v561, 4294901760
        %563 = vmatpush1.msra.mxu0 %v562
        %564 = vmatprep.subr.mxu0 0.0
        %v565 = vand.u32 %v185, 4294901760
        %v566 = vsub.f32 %v185, %v565
        %v567 = vand.u32 %v566, 4294901760
        %568 = vmatpush1.msra.mxu0 %v567
        %569 = vmatprep.subr.mxu0 0.0
        %570 = vmatpush1.msra.mxu0 0.0
        %571 = vmatprep.subr.mxu0 0.0
        %572 = vmatpush1.msra.mxu0 0.0
        %573 = vmatprep.subr.mxu0 0.0
        %574 = vmatpush1.msra.mxu0 0.0
        %575 = vmatprep.subr.mxu0 0.0
        %576 = vmatpush1.msra.mxu0 0.0
        %577 = vmatprep.subr.mxu0 0.0
        %578 = vmatpush1.msra.mxu0 0.0
        %579 = vmatprep.subr.mxu0 0.0
        %580 = vmatpush1.msra.mxu0 0.0
        %581 = vmatprep.subr.mxu0 0.0
        %582 = vmatpush1.msra.mxu0 0.0
        %583 = vmatprep.subr.mxu0 0.0
        %584 = vmatpush1.msra.mxu0 0.0
        %585 = vmatprep.subr.mxu0 0.0
        %586 = vmatpush1.msra.mxu0 0.0
        %587 = vmatprep.subr.mxu0 0.0
        %588 = vmatpush1.msra.mxu0 0.0
        %589 = vmatprep.subr.mxu0 0.0
        %590 = vmatpush1.msra.mxu0 0.0
        %591 = vmatprep.subr.mxu0 0.0
        %592 = vmatpush1.msra.mxu0 0.0
        %593 = vmatprep.subr.mxu0 0.0
        %594 = vmatpush1.msra.mxu0 0.0
        %595 = vmatprep.subr.mxu0 0.0
        %596 = vmatpush1.msra.mxu0 0.0
        %597 = vmatprep.subr.mxu0 0.0
        %598 = vmatpush1.msra.mxu0 0.0
        %599 = vmatprep.subr.mxu0 0.0
        %600 = vmatpush1.msra.mxu0 0.0
        %601 = vmatprep.subr.mxu0 0.0
        %602 = vmatpush1.msra.mxu0 0.0
        %603 = vmatprep.subr.mxu0 0.0
        %604 = vmatpush1.msra.mxu0 0.0
        %605 = vmatprep.subr.mxu0 0.0
        %606 = vmatpush1.msra.mxu0 0.0
        %607 = vmatprep.subr.mxu0 0.0
        %608 = vmatpush1.msra.mxu0 0.0
        %609 = vmatprep.subr.mxu0 0.0
        %610 = vmatpush1.msra.mxu0 0.0
        %611 = vmatprep.subr.mxu0 0.0
        %612 = vmatpush1.msra.mxu0 0.0
        %613 = vmatprep.subr.mxu0 0.0
        %614 = vmatpush1.msra.mxu0 0.0
        %615 = vmatprep.subr.mxu0 0.0
        %616 = vmatpush1.msra.mxu0 0.0
        %617 = vmatprep.subr.mxu0 0.0
        %618 = vmatpush1.msra.mxu0 0.0
        %619 = vmatprep.subr.mxu0 0.0
        %620 = vmatpush1.msra.mxu0 0.0
        %621 = vmatprep.subr.mxu0 0.0
        %622 = vmatpush1.msra.mxu0 0.0
        %623 = vmatprep.subr.mxu0 0.0
        %624 = vmatpush1.msra.mxu0 0.0
        %625 = vmatprep.subr.mxu0 0.0
        %626 = vmatpush1.msra.mxu0 0.0
        %627 = vmatprep.subr.mxu0 0.0
        %628 = vmatpush1.msra.mxu0 0.0
        %629 = vmatprep.mubr.f32.mxu0 0.0
        %v630 = vand.u32 %v214, 4294901760
        %631 = vmatmul.mubr.f32.gmra.mrb[0].mxu0 %v630
        %v632 = vpop.f32.mrb[0].mxu0
        %v633 = vadd.f32 %v548, %v632
        %v634 = vpop.f32.mrb[0].mxu0
        %635 = vmatprep.mubr.f32.mxu0 0.0
        %v636 = vand.u32 %v217, 4294901760
        %637 = vmatmul.mubr.f32.gmra.mrb[0].mxu0 %v636
        %v638 = vpop.f32.mrb[0].mxu0
        %v639 = vadd.f32 %v556, %v638
        %v640 = vpop.f32.mrb[0].mxu0
        %641 = vdwg.mxu0
        %642 = vmatprep.subr.mxu0 0.0
        %v643 = vand.u32 %v184, 4294901760
        %644 = vmatpush1.msra.mxu0 %v643
        %645 = vmatprep.subr.mxu0 0.0
        %v646 = vand.u32 %v185, 4294901760
        %647 = vmatpush1.msra.mxu0 %v646
        %648 = vmatprep.subr.mxu0 0.0
        %649 = vmatpush1.msra.mxu0 0.0
        %650 = vmatprep.subr.mxu0 0.0
        %651 = vmatpush1.msra.mxu0 0.0
        %652 = vmatprep.subr.mxu0 0.0
        %653 = vmatpush1.msra.mxu0 0.0
        %654 = vmatprep.subr.mxu0 0.0
        %655 = vmatpush1.msra.mxu0 0.0
        %656 = vmatprep.subr.mxu0 0.0
        %657 = vmatpush1.msra.mxu0 0.0
        %658 = vmatprep.subr.mxu0 0.0
        %659 = vmatpush1.msra.mxu0 0.0
        %660 = vmatprep.subr.mxu0 0.0
        %661 = vmatpush1.msra.mxu0 0.0
        %662 = vmatprep.subr.mxu0 0.0
        %663 = vmatpush1.msra.mxu0 0.0
        %664 = vmatprep.subr.mxu0 0.0
        %665 = vmatpush1.msra.mxu0 0.0
        %666 = vmatprep.subr.mxu0 0.0
        %667 = vmatpush1.msra.mxu0 0.0
        %668 = vmatprep.subr.mxu0 0.0
        %669 = vmatpush1.msra.mxu0 0.0
        %670 = vmatprep.subr.mxu0 0.0
        %671 = vmatpush1.msra.mxu0 0.0
        %672 = vmatprep.subr.mxu0 0.0
        %673 = vmatpush1.msra.mxu0 0.0
        %674 = vmatprep.subr.mxu0 0.0
        %675 = vmatpush1.msra.mxu0 0.0
        %676 = vmatprep.subr.mxu0 0.0
        %677 = vmatpush1.msra.mxu0 0.0
        %678 = vmatprep.subr.mxu0 0.0
        %679 = vmatpush1.msra.mxu0 0.0
        %680 = vmatprep.subr.mxu0 0.0
        %681 = vmatpush1.msra.mxu0 0.0
        %682 = vmatprep.subr.mxu0 0.0
        %683 = vmatpush1.msra.mxu0 0.0
        %684 = vmatprep.subr.mxu0 0.0
        %685 = vmatpush1.msra.mxu0 0.0
        %686 = vmatprep.subr.mxu0 0.0
        %687 = vmatpush1.msra.mxu0 0.0
        %688 = vmatprep.subr.mxu0 0.0
        %689 = vmatpush1.msra.mxu0 0.0
        %690 = vmatprep.subr.mxu0 0.0
        %691 = vmatpush1.msra.mxu0 0.0
        %692 = vmatprep.subr.mxu0 0.0
        %693 = vmatpush1.msra.mxu0 0.0
        %694 = vmatprep.subr.mxu0 0.0
        %695 = vmatpush1.msra.mxu0 0.0
        %696 = vmatprep.subr.mxu0 0.0
        %697 = vmatpush1.msra.mxu0 0.0
        %698 = vmatprep.subr.mxu0 0.0
        %699 = vmatpush1.msra.mxu0 0.0
        %700 = vmatprep.subr.mxu0 0.0
        %701 = vmatpush1.msra.mxu0 0.0
        %702 = vmatprep.subr.mxu0 0.0
        %703 = vmatpush1.msra.mxu0 0.0
        %704 = vmatprep.subr.mxu0 0.0
        %705 = vmatpush1.msra.mxu0 0.0
        %706 = vmatprep.subr.mxu0 0.0
        %707 = vmatpush1.msra.mxu0 0.0
        %708 = vmatprep.mubr.f32.mxu0 0.0
        %v709 = vand.u32 %v214, 4294901760
        %710 = vmatmul.mubr.f32.gmra.mrb[0].mxu0 %v709
        %v711 = vpop.f32.mrb[0].mxu0
        %v712 = vadd.f32 %v633, %v711
        %v713 = vpop.f32.mrb[0].mxu0
        %714 = vmatprep.mubr.f32.mxu0 0.0
        %v715 = vand.u32 %v217, 4294901760
        %716 = vmatmul.mubr.f32.gmra.mrb[0].mxu0 %v715
        %v717 = vpop.f32.mrb[0].mxu0
        %v718 = vadd.f32 %v639, %v717
        %v719 = vpop.f32.mrb[0].mxu0
        %720 = vdwg.mxu0
        %vm721 = vcmask 113664
        %722 = vst.msk [vmem:[%s182] sm:$0xff] %vm721, %v712
        %vm723 = vcmask 111616
        %724 = vst.msk [vmem:[%s182 + $0x8] sm:$0x3f] %vm723, %v718
        %s725 = scalar_lea.vmem %s154, 16 [#allocation4]
        %v726 = vld [vmem:[%s725] sm:$0xff]
        %v727 = vld [vmem:[%s725 + $0x8] sm:$0xff]
        %v728 = vmul.f32 %v726, 0.31916776
        %v729 = vmul.f32 %v727, 0.31916776
        %v730 = vmul.f32 %v726, 0.36166447
        %v731 = vmul.f32 %v727, 0.36166447
        %v734 = vrot.slane %v730, 1
        %v735 = vrot.slane %v731, 1
        %v736 = vsel %vm194, %v734, %v735
        %v739 = vadd.f32 %v728, %v736
        %v740 = vadd.f32 %v729, %v735
        %v743 = vrot.slane %v728, 2
        %v744 = vrot.slane %v729, 2
        %v745 = vsel %vm204, %v743, %v744
        %v748 = vadd.f32 %v739, %v745
        %v749 = vadd.f32 %v740, %v744
        %v751 = vsel %vm212, %v748, 0
        %v754 = vsel %vm212, %v749, 0
        %756 = vmatprep.subr.mxu0 0.0
        %v757 = vand.u32 %v184, 4294901760
        %758 = vmatpush1.msra.mxu0 %v757
        %759 = vmatprep.subr.mxu0 0.0
        %v760 = vand.u32 %v185, 4294901760
        %761 = vmatpush1.msra.mxu0 %v760
        %762 = vmatprep.subr.mxu0 0.0
        %763 = vmatpush1.msra.mxu0 0.0
        %764 = vmatprep.subr.mxu0 0.0
        %765 = vmatpush1.msra.mxu0 0.0
        %766 = vmatprep.subr.mxu0 0.0
        %767 = vmatpush1.msra.mxu0 0.0
        %768 = vmatprep.subr.mxu0 0.0
        %769 = vmatpush1.msra.mxu0 0.0
        %770 = vmatprep.subr.mxu0 0.0
        %771 = vmatpush1.msra.mxu0 0.0
        %772 = vmatprep.subr.mxu0 0.0
        %773 = vmatpush1.msra.mxu0 0.0
        %774 = vmatprep.subr.mxu0 0.0
        %775 = vmatpush1.msra.mxu0 0.0
        %776 = vmatprep.subr.mxu0 0.0
        %777 = vmatpush1.msra.mxu0 0.0
        %778 = vmatprep.subr.mxu0 0.0
        %779 = vmatpush1.msra.mxu0 0.0
        %780 = vmatprep.subr.mxu0 0.0
        %781 = vmatpush1.msra.mxu0 0.0
        %782 = vmatprep.subr.mxu0 0.0
        %783 = vmatpush1.msra.mxu0 0.0
        %784 = vmatprep.subr.mxu0 0.0
        %785 = vmatpush1.msra.mxu0 0.0
        %786 = vmatprep.subr.mxu0 0.0
        %787 = vmatpush1.msra.mxu0 0.0
        %788 = vmatprep.subr.mxu0 0.0
        %789 = vmatpush1.msra.mxu0 0.0
        %790 = vmatprep.subr.mxu0 0.0
        %791 = vmatpush1.msra.mxu0 0.0
        %792 = vmatprep.subr.mxu0 0.0
        %793 = vmatpush1.msra.mxu0 0.0
        %794 = vmatprep.subr.mxu0 0.0
        %795 = vmatpush1.msra.mxu0 0.0
        %796 = vmatprep.subr.mxu0 0.0
        %797 = vmatpush1.msra.mxu0 0.0
        %798 = vmatprep.subr.mxu0 0.0
        %799 = vmatpush1.msra.mxu0 0.0
        %800 = vmatprep.subr.mxu0 0.0
        %801 = vmatpush1.msra.mxu0 0.0
        %802 = vmatprep.subr.mxu0 0.0
        %803 = vmatpush1.msra.mxu0 0.0
        %804 = vmatprep.subr.mxu0 0.0
        %805 = vmatpush1.msra.mxu0 0.0
        %806 = vmatprep.subr.mxu0 0.0
        %807 = vmatpush1.msra.mxu0 0.0
        %808 = vmatprep.subr.mxu0 0.0
        %809 = vmatpush1.msra.mxu0 0.0
        %810 = vmatprep.subr.mxu0 0.0
        %811 = vmatpush1.msra.mxu0 0.0
        %812 = vmatprep.subr.mxu0 0.0
        %813 = vmatpush1.msra.mxu0 0.0
        %814 = vmatprep.subr.mxu0 0.0
        %815 = vmatpush1.msra.mxu0 0.0
        %816 = vmatprep.subr.mxu0 0.0
        %817 = vmatpush1.msra.mxu0 0.0
        %818 = vmatprep.subr.mxu0 0.0
        %819 = vmatpush1.msra.mxu0 0.0
        %820 = vmatprep.subr.mxu0 0.0
        %821 = vmatpush1.msra.mxu0 0.0
        %822 = vmatprep.mubr.f32.mxu0 0.0
        %v823 = vand.u32 %v751, 4294901760
        %v824 = vsub.f32 %v751, %v823
        %v825 = vand.u32 %v824, 4294901760
        %v826 = vsub.f32 %v824, %v825
        %v827 = vand.u32 %v826, 4294901760
        %828 = vmatmul.mubr.f32.gmra.mrb[0].mxu0 %v827
        %v829 = vpop.f32.mrb[0].mxu0
        %v830 = vadd.f32 0.0, %v829
        %v831 = vpop.f32.mrb[0].mxu0
        %832 = vmatprep.mubr.f32.mxu0 0.0
        %v833 = vand.u32 %v754, 4294901760
        %v834 = vsub.f32 %v754, %v833
        %v835 = vand.u32 %v834, 4294901760
        %v836 = vsub.f32 %v834, %v835
        %v837 = vand.u32 %v836, 4294901760
        %838 = vmatmul.mubr.f32.gmra.mrb[0].mxu0 %v837
        %v839 = vpop.f32.mrb[0].mxu0
        %v840 = vadd.f32 0.0, %v839
        %v841 = vpop.f32.mrb[0].mxu0
        %842 = vdwg.mxu0
        %843 = vmatprep.subr.mxu0 0.0
        %v844 = vand.u32 %v184, 4294901760
        %v845 = vsub.f32 %v184, %v844
        %v846 = vand.u32 %v845, 4294901760
        %v847 = vsub.f32 %v845, %v846
        %v848 = vand.u32 %v847, 4294901760
        %849 = vmatpush1.msra.mxu0 %v848
        %850 = vmatprep.subr.mxu0 0.0
        %v851 = vand.u32 %v185, 4294901760
        %v852 = vsub.f32 %v185, %v851
        %v853 = vand.u32 %v852, 4294901760
        %v854 = vsub.f32 %v852, %v853
        %v855 = vand.u32 %v854, 4294901760
        %856 = vmatpush1.msra.mxu0 %v855
        %857 = vmatprep.subr.mxu0 0.0
        %858 = vmatpush1.msra.mxu0 0.0
        %859 = vmatprep.subr.mxu0 0.0
        %860 = vmatpush1.msra.mxu0 0.0
        %861 = vmatprep.subr.mxu0 0.0
        %862 = vmatpush1.msra.mxu0 0.0
        %863 = vmatprep.subr.mxu0 0.0
        %864 = vmatpush1.msra.mxu0 0.0
        %865 = vmatprep.subr.mxu0 0.0
        %866 = vmatpush1.msra.mxu0 0.0
        %867 = vmatprep.subr.mxu0 0.0
        %868 = vmatpush1.msra.mxu0 0.0
        %869 = vmatprep.subr.mxu0 0.0
        %870 = vmatpush1.msra.mxu0 0.0
        %871 = vmatprep.subr.mxu0 0.0
        %872 = vmatpush1.msra.mxu0 0.0
        %873 = vmatprep.subr.mxu0 0.0
        %874 = vmatpush1.msra.mxu0 0.0
        %875 = vmatprep.subr.mxu0 0.0
        %876 = vmatpush1.msra.mxu0 0.0
        %877 = vmatprep.subr.mxu0 0.0
        %878 = vmatpush1.msra.mxu0 0.0
        %879 = vmatprep.subr.mxu0 0.0
        %880 = vmatpush1.msra.mxu0 0.0
        %881 = vmatprep.subr.mxu0 0.0
        %882 = vmatpush1.msra.mxu0 0.0
        %883 = vmatprep.subr.mxu0 0.0
        %884 = vmatpush1.msra.mxu0 0.0
        %885 = vmatprep.subr.mxu0 0.0
        %886 = vmatpush1.msra.mxu0 0.0
        %887 = vmatprep.subr.mxu0 0.0
        %888 = vmatpush1.msra.mxu0 0.0
        %889 = vmatprep.subr.mxu0 0.0
        %890 = vmatpush1.msra.mxu0 0.0
        %891 = vmatprep.subr.mxu0 0.0
        %892 = vmatpush1.msra.mxu0 0.0
        %893 = vmatprep.subr.mxu0 0.0
        %894 = vmatpush1.msra.mxu0 0.0
        %895 = vmatprep.subr.mxu0 0.0
        %896 = vmatpush1.msra.mxu0 0.0
        %897 = vmatprep.subr.mxu0 0.0
        %898 = vmatpush1.msra.mxu0 0.0
        %899 = vmatprep.subr.mxu0 0.0
        %900 = vmatpush1.msra.mxu0 0.0
        %901 = vmatprep.subr.mxu0 0.0
        %902 = vmatpush1.msra.mxu0 0.0
        %903 = vmatprep.subr.mxu0 0.0
        %904 = vmatpush1.msra.mxu0 0.0
        %905 = vmatprep.subr.mxu0 0.0
        %906 = vmatpush1.msra.mxu0 0.0
        %907 = vmatprep.subr.mxu0 0.0
        %908 = vmatpush1.msra.mxu0 0.0
        %909 = vmatprep.subr.mxu0 0.0
        %910 = vmatpush1.msra.mxu0 0.0
        %911 = vmatprep.subr.mxu0 0.0
        %912 = vmatpush1.msra.mxu0 0.0
        %913 = vmatprep.subr.mxu0 0.0
        %914 = vmatpush1.msra.mxu0 0.0
        %915 = vmatprep.subr.mxu0 0.0
        %916 = vmatpush1.msra.mxu0 0.0
        %917 = vmatprep.mubr.f32.mxu0 0.0
        %v918 = vand.u32 %v751, 4294901760
        %919 = vmatmul.mubr.f32.gmra.mrb[0].mxu0 %v918
        %v920 = vpop.f32.mrb[0].mxu0
        %v921 = vadd.f32 %v830, %v920
        %v922 = vpop.f32.mrb[0].mxu0
        %923 = vmatprep.mubr.f32.mxu0 0.0
        %v924 = vand.u32 %v754, 4294901760
        %925 = vmatmul.mubr.f32.gmra.mrb[0].mxu0 %v924
        %v926 = vpop.f32.mrb[0].mxu0
        %v927 = vadd.f32 %v840, %v926
        %v928 = vpop.f32.mrb[0].mxu0
        %929 = vdwg.mxu0
        %930 = vmatprep.subr.mxu0 0.0
        %v931 = vand.u32 %v184, 4294901760
        %v932 = vsub.f32 %v184, %v931
        %933 = vmatpush1.msra.mxu0 %v932
        %934 = vmatprep.subr.mxu0 0.0
        %v935 = vand.u32 %v185, 4294901760
        %v936 = vsub.f32 %v185, %v935
        %937 = vmatpush1.msra.mxu0 %v936
        %938 = vmatprep.subr.mxu0 0.0
        %939 = vmatpush1.msra.mxu0 0.0
        %940 = vmatprep.subr.mxu0 0.0
        %941 = vmatpush1.msra.mxu0 0.0
        %942 = vmatprep.subr.mxu0 0.0
        %943 = vmatpush1.msra.mxu0 0.0
        %944 = vmatprep.subr.mxu0 0.0
        %945 = vmatpush1.msra.mxu0 0.0
        %946 = vmatprep.subr.mxu0 0.0
        %947 = vmatpush1.msra.mxu0 0.0
        %948 = vmatprep.subr.mxu0 0.0
        %949 = vmatpush1.msra.mxu0 0.0
        %950 = vmatprep.subr.mxu0 0.0
        %951 = vmatpush1.msra.mxu0 0.0
        %952 = vmatprep.subr.mxu0 0.0
        %953 = vmatpush1.msra.mxu0 0.0
        %954 = vmatprep.subr.mxu0 0.0
        %955 = vmatpush1.msra.mxu0 0.0
        %956 = vmatprep.subr.mxu0 0.0
        %957 = vmatpush1.msra.mxu0 0.0
        %958 = vmatprep.subr.mxu0 0.0
        %959 = vmatpush1.msra.mxu0 0.0
        %960 = vmatprep.subr.mxu0 0.0
        %961 = vmatpush1.msra.mxu0 0.0
        %962 = vmatprep.subr.mxu0 0.0
        %963 = vmatpush1.msra.mxu0 0.0
        %964 = vmatprep.subr.mxu0 0.0
        %965 = vmatpush1.msra.mxu0 0.0
        %966 = vmatprep.subr.mxu0 0.0
        %967 = vmatpush1.msra.mxu0 0.0
        %968 = vmatprep.subr.mxu0 0.0
        %969 = vmatpush1.msra.mxu0 0.0
        %970 = vmatprep.subr.mxu0 0.0
        %971 = vmatpush1.msra.mxu0 0.0
        %972 = vmatprep.subr.mxu0 0.0
        %973 = vmatpush1.msra.mxu0 0.0
        %974 = vmatprep.subr.mxu0 0.0
        %975 = vmatpush1.msra.mxu0 0.0
        %976 = vmatprep.subr.mxu0 0.0
        %977 = vmatpush1.msra.mxu0 0.0
        %978 = vmatprep.subr.mxu0 0.0
        %979 = vmatpush1.msra.mxu0 0.0
        %980 = vmatprep.subr.mxu0 0.0
        %981 = vmatpush1.msra.mxu0 0.0
        %982 = vmatprep.subr.mxu0 0.0
        %983 = vmatpush1.msra.mxu0 0.0
        %984 = vmatprep.subr.mxu0 0.0
        %985 = vmatpush1.msra.mxu0 0.0
        %986 = vmatprep.subr.mxu0 0.0
        %987 = vmatpush1.msra.mxu0 0.0
        %988 = vmatprep.subr.mxu0 0.0
        %989 = vmatpush1.msra.mxu0 0.0
        %990 = vmatprep.subr.mxu0 0.0
        %991 = vmatpush1.msra.mxu0 0.0
        %992 = vmatprep.subr.mxu0 0.0
        %993 = vmatpush1.msra.mxu0 0.0
        %994 = vmatprep.subr.mxu0 0.0
        %995 = vmatpush1.msra.mxu0 0.0
        %996 = vmatprep.subr.mxu0 0.0
        %997 = vmatpush1.msra.mxu0 0.0
        %998 = vmatprep.mubr.f32.mxu0 0.0
        %v999 = vand.u32 %v751, 4294901760
        %v1000 = vsub.f32 %v751, %v999
        %1001 = vmatmul.mubr.f32.gmra.mrb[0].mxu0 %v1000
        %v1002 = vpop.f32.mrb[0].mxu0
        %v1003 = vadd.f32 %v921, %v1002
        %v1004 = vpop.f32.mrb[0].mxu0
        %1005 = vmatprep.mubr.f32.mxu0 0.0
        %v1006 = vand.u32 %v754, 4294901760
        %v1007 = vsub.f32 %v754, %v1006
        %1008 = vmatmul.mubr.f32.gmra.mrb[0].mxu0 %v1007
        %v1009 = vpop.f32.mrb[0].mxu0
        %v1010 = vadd.f32 %v927, %v1009
        %v1011 = vpop.f32.mrb[0].mxu0
        %1012 = vdwg.mxu0
        %1013 = vmatprep.subr.mxu0 0.0
        %v1014 = vand.u32 %v184, 4294901760
        %1015 = vmatpush1.msra.mxu0 %v1014
        %1016 = vmatprep.subr.mxu0 0.0
        %v1017 = vand.u32 %v185, 4294901760
        %1018 = vmatpush1.msra.mxu0 %v1017
        %1019 = vmatprep.subr.mxu0 0.0
        %1020 = vmatpush1.msra.mxu0 0.0
        %1021 = vmatprep.subr.mxu0 0.0
        %1022 = vmatpush1.msra.mxu0 0.0
        %1023 = vmatprep.subr.mxu0 0.0
        %1024 = vmatpush1.msra.mxu0 0.0
        %1025 = vmatprep.subr.mxu0 0.0
        %1026 = vmatpush1.msra.mxu0 0.0
        %1027 = vmatprep.subr.mxu0 0.0
        %1028 = vmatpush1.msra.mxu0 0.0
        %1029 = vmatprep.subr.mxu0 0.0
        %1030 = vmatpush1.msra.mxu0 0.0
        %1031 = vmatprep.subr.mxu0 0.0
        %1032 = vmatpush1.msra.mxu0 0.0
        %1033 = vmatprep.subr.mxu0 0.0
        %1034 = vmatpush1.msra.mxu0 0.0
        %1035 = vmatprep.subr.mxu0 0.0
        %1036 = vmatpush1.msra.mxu0 0.0
        %1037 = vmatprep.subr.mxu0 0.0
        %1038 = vmatpush1.msra.mxu0 0.0
        %1039 = vmatprep.subr.mxu0 0.0
        %1040 = vmatpush1.msra.mxu0 0.0
        %1041 = vmatprep.subr.mxu0 0.0
        %1042 = vmatpush1.msra.mxu0 0.0
        %1043 = vmatprep.subr.mxu0 0.0
        %1044 = vmatpush1.msra.mxu0 0.0
        %1045 = vmatprep.subr.mxu0 0.0
        %1046 = vmatpush1.msra.mxu0 0.0
        %1047 = vmatprep.subr.mxu0 0.0
        %1048 = vmatpush1.msra.mxu0 0.0
        %1049 = vmatprep.subr.mxu0 0.0
        %1050 = vmatpush1.msra.mxu0 0.0
        %1051 = vmatprep.subr.mxu0 0.0
        %1052 = vmatpush1.msra.mxu0 0.0
        %1053 = vmatprep.subr.mxu0 0.0
        %1054 = vmatpush1.msra.mxu0 0.0
        %1055 = vmatprep.subr.mxu0 0.0
        %1056 = vmatpush1.msra.mxu0 0.0
        %1057 = vmatprep.subr.mxu0 0.0
        %1058 = vmatpush1.msra.mxu0 0.0
        %1059 = vmatprep.subr.mxu0 0.0
        %1060 = vmatpush1.msra.mxu0 0.0
        %1061 = vmatprep.subr.mxu0 0.0
        %1062 = vmatpush1.msra.mxu0 0.0
        %1063 = vmatprep.subr.mxu0 0.0
        %1064 = vmatpush1.msra.mxu0 0.0
        %1065 = vmatprep.subr.mxu0 0.0
        %1066 = vmatpush1.msra.mxu0 0.0
        %1067 = vmatprep.subr.mxu0 0.0
        %1068 = vmatpush1.msra.mxu0 0.0
        %1069 = vmatprep.subr.mxu0 0.0
        %1070 = vmatpush1.msra.mxu0 0.0
        %1071 = vmatprep.subr.mxu0 0.0
        %1072 = vmatpush1.msra.mxu0 0.0
        %1073 = vmatprep.subr.mxu0 0.0
        %1074 = vmatpush1.msra.mxu0 0.0
        %1075 = vmatprep.subr.mxu0 0.0
        %1076 = vmatpush1.msra.mxu0 0.0
        %1077 = vmatprep.subr.mxu0 0.0
        %1078 = vmatpush1.msra.mxu0 0.0
        %1079 = vmatprep.mubr.f32.mxu0 0.0
        %v1080 = vand.u32 %v751, 4294901760
        %v1081 = vsub.f32 %v751, %v1080
        %v1082 = vand.u32 %v1081, 4294901760
        %1083 = vmatmul.mubr.f32.gmra.mrb[0].mxu0 %v1082
        %v1084 = vpop.f32.mrb[0].mxu0
        %v1085 = vadd.f32 %v1003, %v1084
        %v1086 = vpop.f32.mrb[0].mxu0
        %1087 = vmatprep.mubr.f32.mxu0 0.0
        %v1088 = vand.u32 %v754, 4294901760
        %v1089 = vsub.f32 %v754, %v1088
        %v1090 = vand.u32 %v1089, 4294901760
        %1091 = vmatmul.mubr.f32.gmra.mrb[0].mxu0 %v1090
        %v1092 = vpop.f32.mrb[0].mxu0
        %v1093 = vadd.f32 %v1010, %v1092
        %v1094 = vpop.f32.mrb[0].mxu0
        %1095 = vdwg.mxu0
        %1096 = vmatprep.subr.mxu0 0.0
        %v1097 = vand.u32 %v184, 4294901760
        %v1098 = vsub.f32 %v184, %v1097
        %v1099 = vand.u32 %v1098, 4294901760
        %1100 = vmatpush1.msra.mxu0 %v1099
        %1101 = vmatprep.subr.mxu0 0.0
        %v1102 = vand.u32 %v185, 4294901760
        %v1103 = vsub.f32 %v185, %v1102
        %v1104 = vand.u32 %v1103, 4294901760
        %1105 = vmatpush1.msra.mxu0 %v1104
        %1106 = vmatprep.subr.mxu0 0.0
        %1107 = vmatpush1.msra.mxu0 0.0
        %1108 = vmatprep.subr.mxu0 0.0
        %1109 = vmatpush1.msra.mxu0 0.0
        %1110 = vmatprep.subr.mxu0 0.0
        %1111 = vmatpush1.msra.mxu0 0.0
        %1112 = vmatprep.subr.mxu0 0.0
        %1113 = vmatpush1.msra.mxu0 0.0
        %1114 = vmatprep.subr.mxu0 0.0
        %1115 = vmatpush1.msra.mxu0 0.0
        %1116 = vmatprep.subr.mxu0 0.0
        %1117 = vmatpush1.msra.mxu0 0.0
        %1118 = vmatprep.subr.mxu0 0.0
        %1119 = vmatpush1.msra.mxu0 0.0
        %1120 = vmatprep.subr.mxu0 0.0
        %1121 = vmatpush1.msra.mxu0 0.0
        %1122 = vmatprep.subr.mxu0 0.0
        %1123 = vmatpush1.msra.mxu0 0.0
        %1124 = vmatprep.subr.mxu0 0.0
        %1125 = vmatpush1.msra.mxu0 0.0
        %1126 = vmatprep.subr.mxu0 0.0
        %1127 = vmatpush1.msra.mxu0 0.0
        %1128 = vmatprep.subr.mxu0 0.0
        %1129 = vmatpush1.msra.mxu0 0.0
        %1130 = vmatprep.subr.mxu0 0.0
        %1131 = vmatpush1.msra.mxu0 0.0
        %1132 = vmatprep.subr.mxu0 0.0
        %1133 = vmatpush1.msra.mxu0 0.0
        %1134 = vmatprep.subr.mxu0 0.0
        %1135 = vmatpush1.msra.mxu0 0.0
        %1136 = vmatprep.subr.mxu0 0.0
        %1137 = vmatpush1.msra.mxu0 0.0
        %1138 = vmatprep.subr.mxu0 0.0
        %1139 = vmatpush1.msra.mxu0 0.0
        %1140 = vmatprep.subr.mxu0 0.0
        %1141 = vmatpush1.msra.mxu0 0.0
        %1142 = vmatprep.subr.mxu0 0.0
        %1143 = vmatpush1.msra.mxu0 0.0
        %1144 = vmatprep.subr.mxu0 0.0
        %1145 = vmatpush1.msra.mxu0 0.0
        %1146 = vmatprep.subr.mxu0 0.0
        %1147 = vmatpush1.msra.mxu0 0.0
        %1148 = vmatprep.subr.mxu0 0.0
        %1149 = vmatpush1.msra.mxu0 0.0
        %1150 = vmatprep.subr.mxu0 0.0
        %1151 = vmatpush1.msra.mxu0 0.0
        %1152 = vmatprep.subr.mxu0 0.0
        %1153 = vmatpush1.msra.mxu0 0.0
        %1154 = vmatprep.subr.mxu0 0.0
        %1155 = vmatpush1.msra.mxu0 0.0
        %1156 = vmatprep.subr.mxu0 0.0
        %1157 = vmatpush1.msra.mxu0 0.0
        %1158 = vmatprep.subr.mxu0 0.0
        %1159 = vmatpush1.msra.mxu0 0.0
        %1160 = vmatprep.subr.mxu0 0.0
        %1161 = vmatpush1.msra.mxu0 0.0
        %1162 = vmatprep.subr.mxu0 0.0
        %1163 = vmatpush1.msra.mxu0 0.0
        %1164 = vmatprep.subr.mxu0 0.0
        %1165 = vmatpush1.msra.mxu0 0.0
        %1166 = vmatprep.mubr.f32.mxu0 0.0
        %v1167 = vand.u32 %v751, 4294901760
        %1168 = vmatmul.mubr.f32.gmra.mrb[0].mxu0 %v1167
        %v1169 = vpop.f32.mrb[0].mxu0
        %v1170 = vadd.f32 %v1085, %v1169
        %v1171 = vpop.f32.mrb[0].mxu0
        %1172 = vmatprep.mubr.f32.mxu0 0.0
        %v1173 = vand.u32 %v754, 4294901760
        %1174 = vmatmul.mubr.f32.gmra.mrb[0].mxu0 %v1173
        %v1175 = vpop.f32.mrb[0].mxu0
        %v1176 = vadd.f32 %v1093, %v1175
        %v1177 = vpop.f32.mrb[0].mxu0
        %1178 = vdwg.mxu0
        %1179 = vmatprep.subr.mxu0 0.0
        %v1180 = vand.u32 %v184, 4294901760
        %1181 = vmatpush1.msra.mxu0 %v1180
        %1182 = vmatprep.subr.mxu0 0.0
        %v1183 = vand.u32 %v185, 4294901760
        %1184 = vmatpush1.msra.mxu0 %v1183
        %1185 = vmatprep.subr.mxu0 0.0
        %1186 = vmatpush1.msra.mxu0 0.0
        %1187 = vmatprep.subr.mxu0 0.0
        %1188 = vmatpush1.msra.mxu0 0.0
        %1189 = vmatprep.subr.mxu0 0.0
        %1190 = vmatpush1.msra.mxu0 0.0
        %1191 = vmatprep.subr.mxu0 0.0
        %1192 = vmatpush1.msra.mxu0 0.0
        %1193 = vmatprep.subr.mxu0 0.0
        %1194 = vmatpush1.msra.mxu0 0.0
        %1195 = vmatprep.subr.mxu0 0.0
        %1196 = vmatpush1.msra.mxu0 0.0
        %1197 = vmatprep.subr.mxu0 0.0
        %1198 = vmatpush1.msra.mxu0 0.0
        %1199 = vmatprep.subr.mxu0 0.0
        %1200 = vmatpush1.msra.mxu0 0.0
        %1201 = vmatprep.subr.mxu0 0.0
        %1202 = vmatpush1.msra.mxu0 0.0
        %1203 = vmatprep.subr.mxu0 0.0
        %1204 = vmatpush1.msra.mxu0 0.0
        %1205 = vmatprep.subr.mxu0 0.0
        %1206 = vmatpush1.msra.mxu0 0.0
        %1207 = vmatprep.subr.mxu0 0.0
        %1208 = vmatpush1.msra.mxu0 0.0
        %1209 = vmatprep.subr.mxu0 0.0
        %1210 = vmatpush1.msra.mxu0 0.0
        %1211 = vmatprep.subr.mxu0 0.0
        %1212 = vmatpush1.msra.mxu0 0.0
        %1213 = vmatprep.subr.mxu0 0.0
        %1214 = vmatpush1.msra.mxu0 0.0
        %1215 = vmatprep.subr.mxu0 0.0
        %1216 = vmatpush1.msra.mxu0 0.0
        %1217 = vmatprep.subr.mxu0 0.0
        %1218 = vmatpush1.msra.mxu0 0.0
        %1219 = vmatprep.subr.mxu0 0.0
        %1220 = vmatpush1.msra.mxu0 0.0
        %1221 = vmatprep.subr.mxu0 0.0
        %1222 = vmatpush1.msra.mxu0 0.0
        %1223 = vmatprep.subr.mxu0 0.0
        %1224 = vmatpush1.msra.mxu0 0.0
        %1225 = vmatprep.subr.mxu0 0.0
        %1226 = vmatpush1.msra.mxu0 0.0
        %1227 = vmatprep.subr.mxu0 0.0
        %1228 = vmatpush1.msra.mxu0 0.0
        %1229 = vmatprep.subr.mxu0 0.0
        %1230 = vmatpush1.msra.mxu0 0.0
        %1231 = vmatprep.subr.mxu0 0.0
        %1232 = vmatpush1.msra.mxu0 0.0
        %1233 = vmatprep.subr.mxu0 0.0
        %1234 = vmatpush1.msra.mxu0 0.0
        %1235 = vmatprep.subr.mxu0 0.0
        %1236 = vmatpush1.msra.mxu0 0.0
        %1237 = vmatprep.subr.mxu0 0.0
        %1238 = vmatpush1.msra.mxu0 0.0
        %1239 = vmatprep.subr.mxu0 0.0
        %1240 = vmatpush1.msra.mxu0 0.0
        %1241 = vmatprep.subr.mxu0 0.0
        %1242 = vmatpush1.msra.mxu0 0.0
        %1243 = vmatprep.subr.mxu0 0.0
        %1244 = vmatpush1.msra.mxu0 0.0
        %1245 = vmatprep.mubr.f32.mxu0 0.0
        %v1246 = vand.u32 %v751, 4294901760
        %1247 = vmatmul.mubr.f32.gmra.mrb[0].mxu0 %v1246
        %v1248 = vpop.f32.mrb[0].mxu0
        %v1249 = vadd.f32 %v1170, %v1248
        %v1250 = vpop.f32.mrb[0].mxu0
        %1251 = vmatprep.mubr.f32.mxu0 0.0
        %v1252 = vand.u32 %v754, 4294901760
        %1253 = vmatmul.mubr.f32.gmra.mrb[0].mxu0 %v1252
        %v1254 = vpop.f32.mrb[0].mxu0
        %v1255 = vadd.f32 %v1176, %v1254
        %v1256 = vpop.f32.mrb[0].mxu0
        %1257 = vdwg.mxu0
        %s1258 = scalar_lea.vmem %s182, 16
        %1259 = vst.msk [vmem:[%s1258] sm:$0xff] %vm721, %v1249
        %1260 = vst.msk [vmem:[%s1258 + $0x8] sm:$0x3f] %vm723, %v1255
        %s1261 = scalar_lea.vmem %s154, 32 [#allocation4]
        %v1262 = vld [vmem:[%s1261] sm:$0xff]
        %v1263 = vld [vmem:[%s1261 + $0x8] sm:$0xff]
        %v1264 = vmul.f32 %v1262, 0.31916776
        %v1265 = vmul.f32 %v1263, 0.31916776
        %v1266 = vmul.f32 %v1262, 0.36166447
        %v1267 = vmul.f32 %v1263, 0.36166447
        %v1270 = vrot.slane %v1266, 1
        %v1271 = vrot.slane %v1267, 1
        %v1272 = vsel %vm194, %v1270, %v1271
        %v1275 = vadd.f32 %v1264, %v1272
        %v1276 = vadd.f32 %v1265, %v1271
        %v1279 = vrot.slane %v1264, 2
        %v1280 = vrot.slane %v1265, 2
        %v1281 = vsel %vm204, %v1279, %v1280
        %v1284 = vadd.f32 %v1275, %v1281
        %v1285 = vadd.f32 %v1276, %v1280
        %v1287 = vsel %vm212, %v1284, 0
        %v1290 = vsel %vm212, %v1285, 0
        %1292 = vmatprep.subr.mxu0 0.0
        %v1293 = vand.u32 %v184, 4294901760
        %1294 = vmatpush1.msra.mxu0 %v1293
        %1295 = vmatprep.subr.mxu0 0.0
        %v1296 = vand.u32 %v185, 4294901760
        %1297 = vmatpush1.msra.mxu0 %v1296
        %1298 = vmatprep.subr.mxu0 0.0
        %1299 = vmatpush1.msra.mxu0 0.0
        %1300 = vmatprep.subr.mxu0 0.0
        %1301 = vmatpush1.msra.mxu0 0.0
        %1302 = vmatprep.subr.mxu0 0.0
        %1303 = vmatpush1.msra.mxu0 0.0
        %1304 = vmatprep.subr.mxu0 0.0
        %1305 = vmatpush1.msra.mxu0 0.0
        %1306 = vmatprep.subr.mxu0 0.0
        %1307 = vmatpush1.msra.mxu0 0.0
        %1308 = vmatprep.subr.mxu0 0.0
        %1309 = vmatpush1.msra.mxu0 0.0
        %1310 = vmatprep.subr.mxu0 0.0
        %1311 = vmatpush1.msra.mxu0 0.0
        %1312 = vmatprep.subr.mxu0 0.0
        %1313 = vmatpush1.msra.mxu0 0.0
        %1314 = vmatprep.subr.mxu0 0.0
        %1315 = vmatpush1.msra.mxu0 0.0
        %1316 = vmatprep.subr.mxu0 0.0
        %1317 = vmatpush1.msra.mxu0 0.0
        %1318 = vmatprep.subr.mxu0 0.0
        %1319 = vmatpush1.msra.mxu0 0.0
        %1320 = vmatprep.subr.mxu0 0.0
        %1321 = vmatpush1.msra.mxu0 0.0
        %1322 = vmatprep.subr.mxu0 0.0
        %1323 = vmatpush1.msra.mxu0 0.0
        %1324 = vmatprep.subr.mxu0 0.0
        %1325 = vmatpush1.msra.mxu0 0.0
        %1326 = vmatprep.subr.mxu0 0.0
        %1327 = vmatpush1.msra.mxu0 0.0
        %1328 = vmatprep.subr.mxu0 0.0
        %1329 = vmatpush1.msra.mxu0 0.0
        %1330 = vmatprep.subr.mxu0 0.0
        %1331 = vmatpush1.msra.mxu0 0.0
        %1332 = vmatprep.subr.mxu0 0.0
        %1333 = vmatpush1.msra.mxu0 0.0
        %1334 = vmatprep.subr.mxu0 0.0
        %1335 = vmatpush1.msra.mxu0 0.0
        %1336 = vmatprep.subr.mxu0 0.0
        %1337 = vmatpush1.msra.mxu0 0.0
        %1338 = vmatprep.subr.mxu0 0.0
        %1339 = vmatpush1.msra.mxu0 0.0
        %1340 = vmatprep.subr.mxu0 0.0
        %1341 = vmatpush1.msra.mxu0 0.0
        %1342 = vmatprep.subr.mxu0 0.0
        %1343 = vmatpush1.msra.mxu0 0.0
        %1344 = vmatprep.subr.mxu0 0.0
        %1345 = vmatpush1.msra.mxu0 0.0
        %1346 = vmatprep.subr.mxu0 0.0
        %1347 = vmatpush1.msra.mxu0 0.0
        %1348 = vmatprep.subr.mxu0 0.0
        %1349 = vmatpush1.msra.mxu0 0.0
        %1350 = vmatprep.subr.mxu0 0.0
        %1351 = vmatpush1.msra.mxu0 0.0
        %1352 = vmatprep.subr.mxu0 0.0
        %1353 = vmatpush1.msra.mxu0 0.0
        %1354 = vmatprep.subr.mxu0 0.0
        %1355 = vmatpush1.msra.mxu0 0.0
        %1356 = vmatprep.subr.mxu0 0.0
        %1357 = vmatpush1.msra.mxu0 0.0
        %1358 = vmatprep.mubr.f32.mxu0 0.0
        %v1359 = vand.u32 %v1287, 4294901760
        %v1360 = vsub.f32 %v1287, %v1359
        %v1361 = vand.u32 %v1360, 4294901760
        %v1362 = vsub.f32 %v1360, %v1361
        %v1363 = vand.u32 %v1362, 4294901760
        %1364 = vmatmul.mubr.f32.gmra.mrb[0].mxu0 %v1363
        %v1365 = vpop.f32.mrb[0].mxu0
        %v1366 = vadd.f32 0.0, %v1365
        %v1367 = vpop.f32.mrb[0].mxu0
        %1368 = vmatprep.mubr.f32.mxu0 0.0
        %v1369 = vand.u32 %v1290, 4294901760
        %v1370 = vsub.f32 %v1290, %v1369
        %v1371 = vand.u32 %v1370, 4294901760
        %v1372 = vsub.f32 %v1370, %v1371
        %v1373 = vand.u32 %v1372, 4294901760
        %1374 = vmatmul.mubr.f32.gmra.mrb[0].mxu0 %v1373
        %v1375 = vpop.f32.mrb[0].mxu0
        %v1376 = vadd.f32 0.0, %v1375
        %v1377 = vpop.f32.mrb[0].mxu0
        %1378 = vdwg.mxu0
        %1379 = vmatprep.subr.mxu0 0.0
        %v1380 = vand.u32 %v184, 4294901760
        %v1381 = vsub.f32 %v184, %v1380
        %v1382 = vand.u32 %v1381, 4294901760
        %v1383 = vsub.f32 %v1381, %v1382
        %v1384 = vand.u32 %v1383, 4294901760
        %1385 = vmatpush1.msra.mxu0 %v1384
        %1386 = vmatprep.subr.mxu0 0.0
        %v1387 = vand.u32 %v185, 4294901760
        %v1388 = vsub.f32 %v185, %v1387
        %v1389 = vand.u32 %v1388, 4294901760
        %v1390 = vsub.f32 %v1388, %v1389
        %v1391 = vand.u32 %v1390, 4294901760
        %1392 = vmatpush1.msra.mxu0 %v1391
        %1393 = vmatprep.subr.mxu0 0.0
        %1394 = vmatpush1.msra.mxu0 0.0
        %1395 = vmatprep.subr.mxu0 0.0
        %1396 = vmatpush1.msra.mxu0 0.0
        %1397 = vmatprep.subr.mxu0 0.0
        %1398 = vmatpush1.msra.mxu0 0.0
        %1399 = vmatprep.subr.mxu0 0.0
        %1400 = vmatpush1.msra.mxu0 0.0
        %1401 = vmatprep.subr.mxu0 0.0
        %1402 = vmatpush1.msra.mxu0 0.0
        %1403 = vmatprep.subr.mxu0 0.0
        %1404 = vmatpush1.msra.mxu0 0.0
        %1405 = vmatprep.subr.mxu0 0.0
        %1406 = vmatpush1.msra.mxu0 0.0
        %1407 = vmatprep.subr.mxu0 0.0
        %1408 = vmatpush1.msra.mxu0 0.0
        %1409 = vmatprep.subr.mxu0 0.0
        %1410 = vmatpush1.msra.mxu0 0.0
        %1411 = vmatprep.subr.mxu0 0.0
        %1412 = vmatpush1.msra.mxu0 0.0
        %1413 = vmatprep.subr.mxu0 0.0
        %1414 = vmatpush1.msra.mxu0 0.0
        %1415 = vmatprep.subr.mxu0 0.0
        %1416 = vmatpush1.msra.mxu0 0.0
        %1417 = vmatprep.subr.mxu0 0.0
        %1418 = vmatpush1.msra.mxu0 0.0
        %1419 = vmatprep.subr.mxu0 0.0
        %1420 = vmatpush1.msra.mxu0 0.0
        %1421 = vmatprep.subr.mxu0 0.0
        %1422 = vmatpush1.msra.mxu0 0.0
        %1423 = vmatprep.subr.mxu0 0.0
        %1424 = vmatpush1.msra.mxu0 0.0
        %1425 = vmatprep.subr.mxu0 0.0
        %1426 = vmatpush1.msra.mxu0 0.0
        %1427 = vmatprep.subr.mxu0 0.0
        %1428 = vmatpush1.msra.mxu0 0.0
        %1429 = vmatprep.subr.mxu0 0.0
        %1430 = vmatpush1.msra.mxu0 0.0
        %1431 = vmatprep.subr.mxu0 0.0
        %1432 = vmatpush1.msra.mxu0 0.0
        %1433 = vmatprep.subr.mxu0 0.0
        %1434 = vmatpush1.msra.mxu0 0.0
        %1435 = vmatprep.subr.mxu0 0.0
        %1436 = vmatpush1.msra.mxu0 0.0
        %1437 = vmatprep.subr.mxu0 0.0
        %1438 = vmatpush1.msra.mxu0 0.0
        %1439 = vmatprep.subr.mxu0 0.0
        %1440 = vmatpush1.msra.mxu0 0.0
        %1441 = vmatprep.subr.mxu0 0.0
        %1442 = vmatpush1.msra.mxu0 0.0
        %1443 = vmatprep.subr.mxu0 0.0
        %1444 = vmatpush1.msra.mxu0 0.0
        %1445 = vmatprep.subr.mxu0 0.0
        %1446 = vmatpush1.msra.mxu0 0.0
        %1447 = vmatprep.subr.mxu0 0.0
        %1448 = vmatpush1.msra.mxu0 0.0
        %1449 = vmatprep.subr.mxu0 0.0
        %1450 = vmatpush1.msra.mxu0 0.0
        %1451 = vmatprep.subr.mxu0 0.0
        %1452 = vmatpush1.msra.mxu0 0.0
        %1453 = vmatprep.mubr.f32.mxu0 0.0
        %v1454 = vand.u32 %v1287, 4294901760
        %1455 = vmatmul.mubr.f32.gmra.mrb[0].mxu0 %v1454
        %v1456 = vpop.f32.mrb[0].mxu0
        %v1457 = vadd.f32 %v1366, %v1456
        %v1458 = vpop.f32.mrb[0].mxu0
        %1459 = vmatprep.mubr.f32.mxu0 0.0
        %v1460 = vand.u32 %v1290, 4294901760
        %1461 = vmatmul.mubr.f32.gmra.mrb[0].mxu0 %v1460
        %v1462 = vpop.f32.mrb[0].mxu0
        %v1463 = vadd.f32 %v1376, %v1462
        %v1464 = vpop.f32.mrb[0].mxu0
        %1465 = vdwg.mxu0
        %1466 = vmatprep.subr.mxu0 0.0
        %v1467 = vand.u32 %v184, 4294901760
        %v1468 = vsub.f32 %v184, %v1467
        %1469 = vmatpush1.msra.mxu0 %v1468
        %1470 = vmatprep.subr.mxu0 0.0
        %v1471 = vand.u32 %v185, 4294901760
        %v1472 = vsub.f32 %v185, %v1471
        %1473 = vmatpush1.msra.mxu0 %v1472
        %1474 = vmatprep.subr.mxu0 0.0
        %1475 = vmatpush1.msra.mxu0 0.0
        %1476 = vmatprep.subr.mxu0 0.0
        %1477 = vmatpush1.msra.mxu0 0.0
        %1478 = vmatprep.subr.mxu0 0.0
        %1479 = vmatpush1.msra.mxu0 0.0
        %1480 = vmatprep.subr.mxu0 0.0
        %1481 = vmatpush1.msra.mxu0 0.0
        %1482 = vmatprep.subr.mxu0 0.0
        %1483 = vmatpush1.msra.mxu0 0.0
        %1484 = vmatprep.subr.mxu0 0.0
        %1485 = vmatpush1.msra.mxu0 0.0
        %1486 = vmatprep.subr.mxu0 0.0
        %1487 = vmatpush1.msra.mxu0 0.0
        %1488 = vmatprep.subr.mxu0 0.0
        %1489 = vmatpush1.msra.mxu0 0.0
        %1490 = vmatprep.subr.mxu0 0.0
        %1491 = vmatpush1.msra.mxu0 0.0
        %1492 = vmatprep.subr.mxu0 0.0
        %1493 = vmatpush1.msra.mxu0 0.0
        %1494 = vmatprep.subr.mxu0 0.0
        %1495 = vmatpush1.msra.mxu0 0.0
        %1496 = vmatprep.subr.mxu0 0.0
        %1497 = vmatpush1.msra.mxu0 0.0
        %1498 = vmatprep.subr.mxu0 0.0
        %1499 = vmatpush1.msra.mxu0 0.0
        %1500 = vmatprep.subr.mxu0 0.0
        %1501 = vmatpush1.msra.mxu0 0.0
        %1502 = vmatprep.subr.mxu0 0.0
        %1503 = vmatpush1.msra.mxu0 0.0
        %1504 = vmatprep.subr.mxu0 0.0
        %1505 = vmatpush1.msra.mxu0 0.0
        %1506 = vmatprep.subr.mxu0 0.0
        %1507 = vmatpush1.msra.mxu0 0.0
        %1508 = vmatprep.subr.mxu0 0.0
        %1509 = vmatpush1.msra.mxu0 0.0
        %1510 = vmatprep.subr.mxu0 0.0
        %1511 = vmatpush1.msra.mxu0 0.0
        %1512 = vmatprep.subr.mxu0 0.0
        %1513 = vmatpush1.msra.mxu0 0.0
        %1514 = vmatprep.subr.mxu0 0.0
        %1515 = vmatpush1.msra.mxu0 0.0
        %1516 = vmatprep.subr.mxu0 0.0
        %1517 = vmatpush1.msra.mxu0 0.0
        %1518 = vmatprep.subr.mxu0 0.0
        %1519 = vmatpush1.msra.mxu0 0.0
        %1520 = vmatprep.subr.mxu0 0.0
        %1521 = vmatpush1.msra.mxu0 0.0
        %1522 = vmatprep.subr.mxu0 0.0
        %1523 = vmatpush1.msra.mxu0 0.0
        %1524 = vmatprep.subr.mxu0 0.0
        %1525 = vmatpush1.msra.mxu0 0.0
        %1526 = vmatprep.subr.mxu0 0.0
        %1527 = vmatpush1.msra.mxu0 0.0
        %1528 = vmatprep.subr.mxu0 0.0
        %1529 = vmatpush1.msra.mxu0 0.0
        %1530 = vmatprep.subr.mxu0 0.0
        %1531 = vmatpush1.msra.mxu0 0.0
        %1532 = vmatprep.subr.mxu0 0.0
        %1533 = vmatpush1.msra.mxu0 0.0
        %1534 = vmatprep.mubr.f32.mxu0 0.0
        %v1535 = vand.u32 %v1287, 4294901760
        %v1536 = vsub.f32 %v1287, %v1535
        %1537 = vmatmul.mubr.f32.gmra.mrb[0].mxu0 %v1536
        %v1538 = vpop.f32.mrb[0].mxu0
        %v1539 = vadd.f32 %v1457, %v1538
        %v1540 = vpop.f32.mrb[0].mxu0
        %1541 = vmatprep.mubr.f32.mxu0 0.0
        %v1542 = vand.u32 %v1290, 4294901760
        %v1543 = vsub.f32 %v1290, %v1542
        %1544 = vmatmul.mubr.f32.gmra.mrb[0].mxu0 %v1543
        %v1545 = vpop.f32.mrb[0].mxu0
        %v1546 = vadd.f32 %v1463, %v1545
        %v1547 = vpop.f32.mrb[0].mxu0
        %1548 = vdwg.mxu0
        %1549 = vmatprep.subr.mxu0 0.0
        %v1550 = vand.u32 %v184, 4294901760
        %1551 = vmatpush1.msra.mxu0 %v1550
        %1552 = vmatprep.subr.mxu0 0.0
        %v1553 = vand.u32 %v185, 4294901760
        %1554 = vmatpush1.msra.mxu0 %v1553
        %1555 = vmatprep.subr.mxu0 0.0
        %1556 = vmatpush1.msra.mxu0 0.0
        %1557 = vmatprep.subr.mxu0 0.0
        %1558 = vmatpush1.msra.mxu0 0.0
        %1559 = vmatprep.subr.mxu0 0.0
        %1560 = vmatpush1.msra.mxu0 0.0
        %1561 = vmatprep.subr.mxu0 0.0
        %1562 = vmatpush1.msra.mxu0 0.0
        %1563 = vmatprep.subr.mxu0 0.0
        %1564 = vmatpush1.msra.mxu0 0.0
        %1565 = vmatprep.subr.mxu0 0.0
        %1566 = vmatpush1.msra.mxu0 0.0
        %1567 = vmatprep.subr.mxu0 0.0
        %1568 = vmatpush1.msra.mxu0 0.0
        %1569 = vmatprep.subr.mxu0 0.0
        %1570 = vmatpush1.msra.mxu0 0.0
        %1571 = vmatprep.subr.mxu0 0.0
        %1572 = vmatpush1.msra.mxu0 0.0
        %1573 = vmatprep.subr.mxu0 0.0
        %1574 = vmatpush1.msra.mxu0 0.0
        %1575 = vmatprep.subr.mxu0 0.0
        %1576 = vmatpush1.msra.mxu0 0.0
        %1577 = vmatprep.subr.mxu0 0.0
        %1578 = vmatpush1.msra.mxu0 0.0
        %1579 = vmatprep.subr.mxu0 0.0
        %1580 = vmatpush1.msra.mxu0 0.0
        %1581 = vmatprep.subr.mxu0 0.0
        %1582 = vmatpush1.msra.mxu0 0.0
        %1583 = vmatprep.subr.mxu0 0.0
        %1584 = vmatpush1.msra.mxu0 0.0
        %1585 = vmatprep.subr.mxu0 0.0
        %1586 = vmatpush1.msra.mxu0 0.0
        %1587 = vmatprep.subr.mxu0 0.0
        %1588 = vmatpush1.msra.mxu0 0.0
        %1589 = vmatprep.subr.mxu0 0.0
        %1590 = vmatpush1.msra.mxu0 0.0
        %1591 = vmatprep.subr.mxu0 0.0
        %1592 = vmatpush1.msra.mxu0 0.0
        %1593 = vmatprep.subr.mxu0 0.0
        %1594 = vmatpush1.msra.mxu0 0.0
        %1595 = vmatprep.subr.mxu0 0.0
        %1596 = vmatpush1.msra.mxu0 0.0
        %1597 = vmatprep.subr.mxu0 0.0
        %1598 = vmatpush1.msra.mxu0 0.0
        %1599 = vmatprep.subr.mxu0 0.0
        %1600 = vmatpush1.msra.mxu0 0.0
        %1601 = vmatprep.subr.mxu0 0.0
        %1602 = vmatpush1.msra.mxu0 0.0
        %1603 = vmatprep.subr.mxu0 0.0
        %1604 = vmatpush1.msra.mxu0 0.0
        %1605 = vmatprep.subr.mxu0 0.0
        %1606 = vmatpush1.msra.mxu0 0.0
        %1607 = vmatprep.subr.mxu0 0.0
        %1608 = vmatpush1.msra.mxu0 0.0
        %1609 = vmatprep.subr.mxu0 0.0
        %1610 = vmatpush1.msra.mxu0 0.0
        %1611 = vmatprep.subr.mxu0 0.0
        %1612 = vmatpush1.msra.mxu0 0.0
        %1613 = vmatprep.subr.mxu0 0.0
        %1614 = vmatpush1.msra.mxu0 0.0
        %1615 = vmatprep.mubr.f32.mxu0 0.0
        %v1616 = vand.u32 %v1287, 4294901760
        %v1617 = vsub.f32 %v1287, %v1616
        %v1618 = vand.u32 %v1617, 4294901760
        %1619 = vmatmul.mubr.f32.gmra.mrb[0].mxu0 %v1618
        %v1620 = vpop.f32.mrb[0].mxu0
        %v1621 = vadd.f32 %v1539, %v1620
        %v1622 = vpop.f32.mrb[0].mxu0
        %1623 = vmatprep.mubr.f32.mxu0 0.0
        %v1624 = vand.u32 %v1290, 4294901760
        %v1625 = vsub.f32 %v1290, %v1624
        %v1626 = vand.u32 %v1625, 4294901760
        %1627 = vmatmul.mubr.f32.gmra.mrb[0].mxu0 %v1626
        %v1628 = vpop.f32.mrb[0].mxu0
        %v1629 = vadd.f32 %v1546, %v1628
        %v1630 = vpop.f32.mrb[0].mxu0
        %1631 = vdwg.mxu0
        %1632 = vmatprep.subr.mxu0 0.0
        %v1633 = vand.u32 %v184, 4294901760
        %v1634 = vsub.f32 %v184, %v1633
        %v1635 = vand.u32 %v1634, 4294901760
        %1636 = vmatpush1.msra.mxu0 %v1635
        %1637 = vmatprep.subr.mxu0 0.0
        %v1638 = vand.u32 %v185, 4294901760
        %v1639 = vsub.f32 %v185, %v1638
        %v1640 = vand.u32 %v1639, 4294901760
        %1641 = vmatpush1.msra.mxu0 %v1640
        %1642 = vmatprep.subr.mxu0 0.0
        %1643 = vmatpush1.msra.mxu0 0.0
        %1644 = vmatprep.subr.mxu0 0.0
        %1645 = vmatpush1.msra.mxu0 0.0
        %1646 = vmatprep.subr.mxu0 0.0
        %1647 = vmatpush1.msra.mxu0 0.0
        %1648 = vmatprep.subr.mxu0 0.0
        %1649 = vmatpush1.msra.mxu0 0.0
        %1650 = vmatprep.subr.mxu0 0.0
        %1651 = vmatpush1.msra.mxu0 0.0
        %1652 = vmatprep.subr.mxu0 0.0
        %1653 = vmatpush1.msra.mxu0 0.0
        %1654 = vmatprep.subr.mxu0 0.0
        %1655 = vmatpush1.msra.mxu0 0.0
        %1656 = vmatprep.subr.mxu0 0.0
        %1657 = vmatpush1.msra.mxu0 0.0
        %1658 = vmatprep.subr.mxu0 0.0
        %1659 = vmatpush1.msra.mxu0 0.0
        %1660 = vmatprep.subr.mxu0 0.0
        %1661 = vmatpush1.msra.mxu0 0.0
        %1662 = vmatprep.subr.mxu0 0.0
        %1663 = vmatpush1.msra.mxu0 0.0
        %1664 = vmatprep.subr.mxu0 0.0
        %1665 = vmatpush1.msra.mxu0 0.0
        %1666 = vmatprep.subr.mxu0 0.0
        %1667 = vmatpush1.msra.mxu0 0.0
        %1668 = vmatprep.subr.mxu0 0.0
        %1669 = vmatpush1.msra.mxu0 0.0
        %1670 = vmatprep.subr.mxu0 0.0
        %1671 = vmatpush1.msra.mxu0 0.0
        %1672 = vmatprep.subr.mxu0 0.0
        %1673 = vmatpush1.msra.mxu0 0.0
        %1674 = vmatprep.subr.mxu0 0.0
        %1675 = vmatpush1.msra.mxu0 0.0
        %1676 = vmatprep.subr.mxu0 0.0
        %1677 = vmatpush1.msra.mxu0 0.0
        %1678 = vmatprep.subr.mxu0 0.0
        %1679 = vmatpush1.msra.mxu0 0.0
        %1680 = vmatprep.subr.mxu0 0.0
        %1681 = vmatpush1.msra.mxu0 0.0
        %1682 = vmatprep.subr.mxu0 0.0
        %1683 = vmatpush1.msra.mxu0 0.0
        %1684 = vmatprep.subr.mxu0 0.0
        %1685 = vmatpush1.msra.mxu0 0.0
        %1686 = vmatprep.subr.mxu0 0.0
        %1687 = vmatpush1.msra.mxu0 0.0
        %1688 = vmatprep.subr.mxu0 0.0
        %1689 = vmatpush1.msra.mxu0 0.0
        %1690 = vmatprep.subr.mxu0 0.0
        %1691 = vmatpush1.msra.mxu0 0.0
        %1692 = vmatprep.subr.mxu0 0.0
        %1693 = vmatpush1.msra.mxu0 0.0
        %1694 = vmatprep.subr.mxu0 0.0
        %1695 = vmatpush1.msra.mxu0 0.0
        %1696 = vmatprep.subr.mxu0 0.0
        %1697 = vmatpush1.msra.mxu0 0.0
        %1698 = vmatprep.subr.mxu0 0.0
        %1699 = vmatpush1.msra.mxu0 0.0
        %1700 = vmatprep.subr.mxu0 0.0
        %1701 = vmatpush1.msra.mxu0 0.0
        %1702 = vmatprep.mubr.f32.mxu0 0.0
        %v1703 = vand.u32 %v1287, 4294901760
        %1704 = vmatmul.mubr.f32.gmra.mrb[0].mxu0 %v1703
        %v1705 = vpop.f32.mrb[0].mxu0
        %v1706 = vadd.f32 %v1621, %v1705
        %v1707 = vpop.f32.mrb[0].mxu0
        %1708 = vmatprep.mubr.f32.mxu0 0.0
        %v1709 = vand.u32 %v1290, 4294901760
        %1710 = vmatmul.mubr.f32.gmra.mrb[0].mxu0 %v1709
        %v1711 = vpop.f32.mrb[0].mxu0
        %v1712 = vadd.f32 %v1629, %v1711
        %v1713 = vpop.f32.mrb[0].mxu0
        %1714 = vdwg.mxu0
        %1715 = vmatprep.subr.mxu0 0.0
        %v1716 = vand.u32 %v184, 4294901760
        %1717 = vmatpush1.msra.mxu0 %v1716
        %1718 = vmatprep.subr.mxu0 0.0
        %v1719 = vand.u32 %v185, 4294901760
        %1720 = vmatpush1.msra.mxu0 %v1719
        %1721 = vmatprep.subr.mxu0 0.0
        %1722 = vmatpush1.msra.mxu0 0.0
        %1723 = vmatprep.subr.mxu0 0.0
        %1724 = vmatpush1.msra.mxu0 0.0
        %1725 = vmatprep.subr.mxu0 0.0
        %1726 = vmatpush1.msra.mxu0 0.0
        %1727 = vmatprep.subr.mxu0 0.0
        %1728 = vmatpush1.msra.mxu0 0.0
        %1729 = vmatprep.subr.mxu0 0.0
        %1730 = vmatpush1.msra.mxu0 0.0
        %1731 = vmatprep.subr.mxu0 0.0
        %1732 = vmatpush1.msra.mxu0 0.0
        %1733 = vmatprep.subr.mxu0 0.0
        %1734 = vmatpush1.msra.mxu0 0.0
        %1735 = vmatprep.subr.mxu0 0.0
        %1736 = vmatpush1.msra.mxu0 0.0
        %1737 = vmatprep.subr.mxu0 0.0
        %1738 = vmatpush1.msra.mxu0 0.0
        %1739 = vmatprep.subr.mxu0 0.0
        %1740 = vmatpush1.msra.mxu0 0.0
        %1741 = vmatprep.subr.mxu0 0.0
        %1742 = vmatpush1.msra.mxu0 0.0
        %1743 = vmatprep.subr.mxu0 0.0
        %1744 = vmatpush1.msra.mxu0 0.0
        %1745 = vmatprep.subr.mxu0 0.0
        %1746 = vmatpush1.msra.mxu0 0.0
        %1747 = vmatprep.subr.mxu0 0.0
        %1748 = vmatpush1.msra.mxu0 0.0
        %1749 = vmatprep.subr.mxu0 0.0
        %1750 = vmatpush1.msra.mxu0 0.0
        %1751 = vmatprep.subr.mxu0 0.0
        %1752 = vmatpush1.msra.mxu0 0.0
        %1753 = vmatprep.subr.mxu0 0.0
        %1754 = vmatpush1.msra.mxu0 0.0
        %1755 = vmatprep.subr.mxu0 0.0
        %1756 = vmatpush1.msra.mxu0 0.0
        %1757 = vmatprep.subr.mxu0 0.0
        %1758 = vmatpush1.msra.mxu0 0.0
        %1759 = vmatprep.subr.mxu0 0.0
        %1760 = vmatpush1.msra.mxu0 0.0
        %1761 = vmatprep.subr.mxu0 0.0
        %1762 = vmatpush1.msra.mxu0 0.0
        %1763 = vmatprep.subr.mxu0 0.0
        %1764 = vmatpush1.msra.mxu0 0.0
        %1765 = vmatprep.subr.mxu0 0.0
        %1766 = vmatpush1.msra.mxu0 0.0
        %1767 = vmatprep.subr.mxu0 0.0
        %1768 = vmatpush1.msra.mxu0 0.0
        %1769 = vmatprep.subr.mxu0 0.0
        %1770 = vmatpush1.msra.mxu0 0.0
        %1771 = vmatprep.subr.mxu0 0.0
        %1772 = vmatpush1.msra.mxu0 0.0
        %1773 = vmatprep.subr.mxu0 0.0
        %1774 = vmatpush1.msra.mxu0 0.0
        %1775 = vmatprep.subr.mxu0 0.0
        %1776 = vmatpush1.msra.mxu0 0.0
        %1777 = vmatprep.subr.mxu0 0.0
        %1778 = vmatpush1.msra.mxu0 0.0
        %1779 = vmatprep.subr.mxu0 0.0
        %1780 = vmatpush1.msra.mxu0 0.0
        %1781 = vmatprep.mubr.f32.mxu0 0.0
        %v1782 = vand.u32 %v1287, 4294901760
        %1783 = vmatmul.mubr.f32.gmra.mrb[0].mxu0 %v1782
        %v1784 = vpop.f32.mrb[0].mxu0
        %v1785 = vadd.f32 %v1706, %v1784
        %v1786 = vpop.f32.mrb[0].mxu0
        %1787 = vmatprep.mubr.f32.mxu0 0.0
        %v1788 = vand.u32 %v1290, 4294901760
        %1789 = vmatmul.mubr.f32.gmra.mrb[0].mxu0 %v1788
        %v1790 = vpop.f32.mrb[0].mxu0
        %v1791 = vadd.f32 %v1712, %v1790
        %v1792 = vpop.f32.mrb[0].mxu0
        %1793 = vdwg.mxu0
        %s1794 = scalar_lea.vmem %s182, 32
        %1795 = vst.msk [vmem:[%s1794] sm:$0xff] %vm721, %v1785
        %1796 = vst.msk [vmem:[%s1794 + $0x8] sm:$0x3f] %vm723, %v1791
        %s1797 = scalar_lea.vmem %s154, 48 [#allocation4]
        %v1798 = vld [vmem:[%s1797] sm:$0xff]
        %v1799 = vld [vmem:[%s1797 + $0x8] sm:$0xff]
        %v1800 = vmul.f32 %v1798, 0.31916776
        %v1801 = vmul.f32 %v1799, 0.31916776
        %v1802 = vmul.f32 %v1798, 0.36166447
        %v1803 = vmul.f32 %v1799, 0.36166447
        %v1806 = vrot.slane %v1802, 1
        %v1807 = vrot.slane %v1803, 1
        %v1808 = vsel %vm194, %v1806, %v1807
        %v1811 = vadd.f32 %v1800, %v1808
        %v1812 = vadd.f32 %v1801, %v1807
        %v1815 = vrot.slane %v1800, 2
        %v1816 = vrot.slane %v1801, 2
        %v1817 = vsel %vm204, %v1815, %v1816
        %v1820 = vadd.f32 %v1811, %v1817
        %v1821 = vadd.f32 %v1812, %v1816
        %v1823 = vsel %vm212, %v1820, 0
        %v1826 = vsel %vm212, %v1821, 0
        %1828 = vmatprep.subr.mxu0 0.0
        %v1829 = vand.u32 %v184, 4294901760
        %1830 = vmatpush1.msra.mxu0 %v1829
        %1831 = vmatprep.subr.mxu0 0.0
        %v1832 = vand.u32 %v185, 4294901760
        %1833 = vmatpush1.msra.mxu0 %v1832
        %1834 = vmatprep.subr.mxu0 0.0
        %1835 = vmatpush1.msra.mxu0 0.0
        %1836 = vmatprep.subr.mxu0 0.0
        %1837 = vmatpush1.msra.mxu0 0.0
        %1838 = vmatprep.subr.mxu0 0.0
        %1839 = vmatpush1.msra.mxu0 0.0
        %1840 = vmatprep.subr.mxu0 0.0
        %1841 = vmatpush1.msra.mxu0 0.0
        %1842 = vmatprep.subr.mxu0 0.0
        %1843 = vmatpush1.msra.mxu0 0.0
        %1844 = vmatprep.subr.mxu0 0.0
        %1845 = vmatpush1.msra.mxu0 0.0
        %1846 = vmatprep.subr.mxu0 0.0
        %1847 = vmatpush1.msra.mxu0 0.0
        %1848 = vmatprep.subr.mxu0 0.0
        %1849 = vmatpush1.msra.mxu0 0.0
        %1850 = vmatprep.subr.mxu0 0.0
        %1851 = vmatpush1.msra.mxu0 0.0
        %1852 = vmatprep.subr.mxu0 0.0
        %1853 = vmatpush1.msra.mxu0 0.0
        %1854 = vmatprep.subr.mxu0 0.0
        %1855 = vmatpush1.msra.mxu0 0.0
        %1856 = vmatprep.subr.mxu0 0.0
        %1857 = vmatpush1.msra.mxu0 0.0
        %1858 = vmatprep.subr.mxu0 0.0
        %1859 = vmatpush1.msra.mxu0 0.0
        %1860 = vmatprep.subr.mxu0 0.0
        %1861 = vmatpush1.msra.mxu0 0.0
        %1862 = vmatprep.subr.mxu0 0.0
        %1863 = vmatpush1.msra.mxu0 0.0
        %1864 = vmatprep.subr.mxu0 0.0
        %1865 = vmatpush1.msra.mxu0 0.0
        %1866 = vmatprep.subr.mxu0 0.0
        %1867 = vmatpush1.msra.mxu0 0.0
        %1868 = vmatprep.subr.mxu0 0.0
        %1869 = vmatpush1.msra.mxu0 0.0
        %1870 = vmatprep.subr.mxu0 0.0
        %1871 = vmatpush1.msra.mxu0 0.0
        %1872 = vmatprep.subr.mxu0 0.0
        %1873 = vmatpush1.msra.mxu0 0.0
        %1874 = vmatprep.subr.mxu0 0.0
        %1875 = vmatpush1.msra.mxu0 0.0
        %1876 = vmatprep.subr.mxu0 0.0
        %1877 = vmatpush1.msra.mxu0 0.0
        %1878 = vmatprep.subr.mxu0 0.0
        %1879 = vmatpush1.msra.mxu0 0.0
        %1880 = vmatprep.subr.mxu0 0.0
        %1881 = vmatpush1.msra.mxu0 0.0
        %1882 = vmatprep.subr.mxu0 0.0
        %1883 = vmatpush1.msra.mxu0 0.0
        %1884 = vmatprep.subr.mxu0 0.0
        %1885 = vmatpush1.msra.mxu0 0.0
        %1886 = vmatprep.subr.mxu0 0.0
        %1887 = vmatpush1.msra.mxu0 0.0
        %1888 = vmatprep.subr.mxu0 0.0
        %1889 = vmatpush1.msra.mxu0 0.0
        %1890 = vmatprep.subr.mxu0 0.0
        %1891 = vmatpush1.msra.mxu0 0.0
        %1892 = vmatprep.subr.mxu0 0.0
        %1893 = vmatpush1.msra.mxu0 0.0
        %1894 = vmatprep.mubr.f32.mxu0 0.0
        %v1895 = vand.u32 %v1823, 4294901760
        %v1896 = vsub.f32 %v1823, %v1895
        %v1897 = vand.u32 %v1896, 4294901760
        %v1898 = vsub.f32 %v1896, %v1897
        %v1899 = vand.u32 %v1898, 4294901760
        %1900 = vmatmul.mubr.f32.gmra.mrb[0].mxu0 %v1899
        %v1901 = vpop.f32.mrb[0].mxu0
        %v1902 = vadd.f32 0.0, %v1901
        %v1903 = vpop.f32.mrb[0].mxu0
        %1904 = vmatprep.mubr.f32.mxu0 0.0
        %v1905 = vand.u32 %v1826, 4294901760
        %v1906 = vsub.f32 %v1826, %v1905
        %v1907 = vand.u32 %v1906, 4294901760
        %v1908 = vsub.f32 %v1906, %v1907
        %v1909 = vand.u32 %v1908, 4294901760
        %1910 = vmatmul.mubr.f32.gmra.mrb[0].mxu0 %v1909
        %v1911 = vpop.f32.mrb[0].mxu0
        %v1912 = vadd.f32 0.0, %v1911
        %v1913 = vpop.f32.mrb[0].mxu0
        %1914 = vdwg.mxu0
        %1915 = vmatprep.subr.mxu0 0.0
        %v1916 = vand.u32 %v184, 4294901760
        %v1917 = vsub.f32 %v184, %v1916
        %v1918 = vand.u32 %v1917, 4294901760
        %v1919 = vsub.f32 %v1917, %v1918
        %v1920 = vand.u32 %v1919, 4294901760
        %1921 = vmatpush1.msra.mxu0 %v1920
        %1922 = vmatprep.subr.mxu0 0.0
        %v1923 = vand.u32 %v185, 4294901760
        %v1924 = vsub.f32 %v185, %v1923
        %v1925 = vand.u32 %v1924, 4294901760
        %v1926 = vsub.f32 %v1924, %v1925
        %v1927 = vand.u32 %v1926, 4294901760
        %1928 = vmatpush1.msra.mxu0 %v1927
        %1929 = vmatprep.subr.mxu0 0.0
        %1930 = vmatpush1.msra.mxu0 0.0
        %1931 = vmatprep.subr.mxu0 0.0
        %1932 = vmatpush1.msra.mxu0 0.0
        %1933 = vmatprep.subr.mxu0 0.0
        %1934 = vmatpush1.msra.mxu0 0.0
        %1935 = vmatprep.subr.mxu0 0.0
        %1936 = vmatpush1.msra.mxu0 0.0
        %1937 = vmatprep.subr.mxu0 0.0
        %1938 = vmatpush1.msra.mxu0 0.0
        %1939 = vmatprep.subr.mxu0 0.0
        %1940 = vmatpush1.msra.mxu0 0.0
        %1941 = vmatprep.subr.mxu0 0.0
        %1942 = vmatpush1.msra.mxu0 0.0
        %1943 = vmatprep.subr.mxu0 0.0
        %1944 = vmatpush1.msra.mxu0 0.0
        %1945 = vmatprep.subr.mxu0 0.0
        %1946 = vmatpush1.msra.mxu0 0.0
        %1947 = vmatprep.subr.mxu0 0.0
        %1948 = vmatpush1.msra.mxu0 0.0
        %1949 = vmatprep.subr.mxu0 0.0
        %1950 = vmatpush1.msra.mxu0 0.0
        %1951 = vmatprep.subr.mxu0 0.0
        %1952 = vmatpush1.msra.mxu0 0.0
        %1953 = vmatprep.subr.mxu0 0.0
        %1954 = vmatpush1.msra.mxu0 0.0
        %1955 = vmatprep.subr.mxu0 0.0
        %1956 = vmatpush1.msra.mxu0 0.0
        %1957 = vmatprep.subr.mxu0 0.0
        %1958 = vmatpush1.msra.mxu0 0.0
        %1959 = vmatprep.subr.mxu0 0.0
        %1960 = vmatpush1.msra.mxu0 0.0
        %1961 = vmatprep.subr.mxu0 0.0
        %1962 = vmatpush1.msra.mxu0 0.0
        %1963 = vmatprep.subr.mxu0 0.0
        %1964 = vmatpush1.msra.mxu0 0.0
        %1965 = vmatprep.subr.mxu0 0.0
        %1966 = vmatpush1.msra.mxu0 0.0
        %1967 = vmatprep.subr.mxu0 0.0
        %1968 = vmatpush1.msra.mxu0 0.0
        %1969 = vmatprep.subr.mxu0 0.0
        %1970 = vmatpush1.msra.mxu0 0.0
        %1971 = vmatprep.subr.mxu0 0.0
        %1972 = vmatpush1.msra.mxu0 0.0
        %1973 = vmatprep.subr.mxu0 0.0
        %1974 = vmatpush1.msra.mxu0 0.0
        %1975 = vmatprep.subr.mxu0 0.0
        %1976 = vmatpush1.msra.mxu0 0.0
        %1977 = vmatprep.subr.mxu0 0.0
        %1978 = vmatpush1.msra.mxu0 0.0
        %1979 = vmatprep.subr.mxu0 0.0
        %1980 = vmatpush1.msra.mxu0 0.0
        %1981 = vmatprep.subr.mxu0 0.0
        %1982 = vmatpush1.msra.mxu0 0.0
        %1983 = vmatprep.subr.mxu0 0.0
        %1984 = vmatpush1.msra.mxu0 0.0
        %1985 = vmatprep.subr.mxu0 0.0
        %1986 = vmatpush1.msra.mxu0 0.0
        %1987 = vmatprep.subr.mxu0 0.0
        %1988 = vmatpush1.msra.mxu0 0.0
        %1989 = vmatprep.mubr.f32.mxu0 0.0
        %v1990 = vand.u32 %v1823, 4294901760
        %1991 = vmatmul.mubr.f32.gmra.mrb[0].mxu0 %v1990
        %v1992 = vpop.f32.mrb[0].mxu0
        %v1993 = vadd.f32 %v1902, %v1992
        %v1994 = vpop.f32.mrb[0].mxu0
        %1995 = vmatprep.mubr.f32.mxu0 0.0
        %v1996 = vand.u32 %v1826, 4294901760
        %1997 = vmatmul.mubr.f32.gmra.mrb[0].mxu0 %v1996
        %v1998 = vpop.f32.mrb[0].mxu0
        %v1999 = vadd.f32 %v1912, %v1998
        %v2000 = vpop.f32.mrb[0].mxu0
        %2001 = vdwg.mxu0
        %2002 = vmatprep.subr.mxu0 0.0
        %v2003 = vand.u32 %v184, 4294901760
        %v2004 = vsub.f32 %v184, %v2003
        %2005 = vmatpush1.msra.mxu0 %v2004
        %2006 = vmatprep.subr.mxu0 0.0
        %v2007 = vand.u32 %v185, 4294901760
        %v2008 = vsub.f32 %v185, %v2007
        %2009 = vmatpush1.msra.mxu0 %v2008
        %2010 = vmatprep.subr.mxu0 0.0
        %2011 = vmatpush1.msra.mxu0 0.0
        %2012 = vmatprep.subr.mxu0 0.0
        %2013 = vmatpush1.msra.mxu0 0.0
        %2014 = vmatprep.subr.mxu0 0.0
        %2015 = vmatpush1.msra.mxu0 0.0
        %2016 = vmatprep.subr.mxu0 0.0
        %2017 = vmatpush1.msra.mxu0 0.0
        %2018 = vmatprep.subr.mxu0 0.0
        %2019 = vmatpush1.msra.mxu0 0.0
        %2020 = vmatprep.subr.mxu0 0.0
        %2021 = vmatpush1.msra.mxu0 0.0
        %2022 = vmatprep.subr.mxu0 0.0
        %2023 = vmatpush1.msra.mxu0 0.0
        %2024 = vmatprep.subr.mxu0 0.0
        %2025 = vmatpush1.msra.mxu0 0.0
        %2026 = vmatprep.subr.mxu0 0.0
        %2027 = vmatpush1.msra.mxu0 0.0
        %2028 = vmatprep.subr.mxu0 0.0
        %2029 = vmatpush1.msra.mxu0 0.0
        %2030 = vmatprep.subr.mxu0 0.0
        %2031 = vmatpush1.msra.mxu0 0.0
        %2032 = vmatprep.subr.mxu0 0.0
        %2033 = vmatpush1.msra.mxu0 0.0
        %2034 = vmatprep.subr.mxu0 0.0
        %2035 = vmatpush1.msra.mxu0 0.0
        %2036 = vmatprep.subr.mxu0 0.0
        %2037 = vmatpush1.msra.mxu0 0.0
        %2038 = vmatprep.subr.mxu0 0.0
        %2039 = vmatpush1.msra.mxu0 0.0
        %2040 = vmatprep.subr.mxu0 0.0
        %2041 = vmatpush1.msra.mxu0 0.0
        %2042 = vmatprep.subr.mxu0 0.0
        %2043 = vmatpush1.msra.mxu0 0.0
        %2044 = vmatprep.subr.mxu0 0.0
        %2045 = vmatpush1.msra.mxu0 0.0
        %2046 = vmatprep.subr.mxu0 0.0
        %2047 = vmatpush1.msra.mxu0 0.0
        %2048 = vmatprep.subr.mxu0 0.0
        %2049 = vmatpush1.msra.mxu0 0.0
        %2050 = vmatprep.subr.mxu0 0.0
        %2051 = vmatpush1.msra.mxu0 0.0
        %2052 = vmatprep.subr.mxu0 0.0
        %2053 = vmatpush1.msra.mxu0 0.0
        %2054 = vmatprep.subr.mxu0 0.0
        %2055 = vmatpush1.msra.mxu0 0.0
        %2056 = vmatprep.subr.mxu0 0.0
        %2057 = vmatpush1.msra.mxu0 0.0
        %2058 = vmatprep.subr.mxu0 0.0
        %2059 = vmatpush1.msra.mxu0 0.0
        %2060 = vmatprep.subr.mxu0 0.0
        %2061 = vmatpush1.msra.mxu0 0.0
        %2062 = vmatprep.subr.mxu0 0.0
        %2063 = vmatpush1.msra.mxu0 0.0
        %2064 = vmatprep.subr.mxu0 0.0
        %2065 = vmatpush1.msra.mxu0 0.0
        %2066 = vmatprep.subr.mxu0 0.0
        %2067 = vmatpush1.msra.mxu0 0.0
        %2068 = vmatprep.subr.mxu0 0.0
        %2069 = vmatpush1.msra.mxu0 0.0
        %2070 = vmatprep.mubr.f32.mxu0 0.0
        %v2071 = vand.u32 %v1823, 4294901760
        %v2072 = vsub.f32 %v1823, %v2071
        %2073 = vmatmul.mubr.f32.gmra.mrb[0].mxu0 %v2072
        %v2074 = vpop.f32.mrb[0].mxu0
        %v2075 = vadd.f32 %v1993, %v2074
        %v2076 = vpop.f32.mrb[0].mxu0
        %2077 = vmatprep.mubr.f32.mxu0 0.0
        %v2078 = vand.u32 %v1826, 4294901760
        %v2079 = vsub.f32 %v1826, %v2078
        %2080 = vmatmul.mubr.f32.gmra.mrb[0].mxu0 %v2079
        %v2081 = vpop.f32.mrb[0].mxu0
        %v2082 = vadd.f32 %v1999, %v2081
        %v2083 = vpop.f32.mrb[0].mxu0
        %2084 = vdwg.mxu0
        %2085 = vmatprep.subr.mxu0 0.0
        %v2086 = vand.u32 %v184, 4294901760
        %2087 = vmatpush1.msra.mxu0 %v2086
        %2088 = vmatprep.subr.mxu0 0.0
        %v2089 = vand.u32 %v185, 4294901760
        %2090 = vmatpush1.msra.mxu0 %v2089
        %2091 = vmatprep.subr.mxu0 0.0
        %2092 = vmatpush1.msra.mxu0 0.0
        %2093 = vmatprep.subr.mxu0 0.0
        %2094 = vmatpush1.msra.mxu0 0.0
        %2095 = vmatprep.subr.mxu0 0.0
        %2096 = vmatpush1.msra.mxu0 0.0
        %2097 = vmatprep.subr.mxu0 0.0
        %2098 = vmatpush1.msra.mxu0 0.0
        %2099 = vmatprep.subr.mxu0 0.0
        %2100 = vmatpush1.msra.mxu0 0.0
        %2101 = vmatprep.subr.mxu0 0.0
        %2102 = vmatpush1.msra.mxu0 0.0
        %2103 = vmatprep.subr.mxu0 0.0
        %2104 = vmatpush1.msra.mxu0 0.0
        %2105 = vmatprep.subr.mxu0 0.0
        %2106 = vmatpush1.msra.mxu0 0.0
        %2107 = vmatprep.subr.mxu0 0.0
        %2108 = vmatpush1.msra.mxu0 0.0
        %2109 = vmatprep.subr.mxu0 0.0
        %2110 = vmatpush1.msra.mxu0 0.0
        %2111 = vmatprep.subr.mxu0 0.0
        %2112 = vmatpush1.msra.mxu0 0.0
        %2113 = vmatprep.subr.mxu0 0.0
        %2114 = vmatpush1.msra.mxu0 0.0
        %2115 = vmatprep.subr.mxu0 0.0
        %2116 = vmatpush1.msra.mxu0 0.0
        %2117 = vmatprep.subr.mxu0 0.0
        %2118 = vmatpush1.msra.mxu0 0.0
        %2119 = vmatprep.subr.mxu0 0.0
        %2120 = vmatpush1.msra.mxu0 0.0
        %2121 = vmatprep.subr.mxu0 0.0
        %2122 = vmatpush1.msra.mxu0 0.0
        %2123 = vmatprep.subr.mxu0 0.0
        %2124 = vmatpush1.msra.mxu0 0.0
        %2125 = vmatprep.subr.mxu0 0.0
        %2126 = vmatpush1.msra.mxu0 0.0
        %2127 = vmatprep.subr.mxu0 0.0
        %2128 = vmatpush1.msra.mxu0 0.0
        %2129 = vmatprep.subr.mxu0 0.0
        %2130 = vmatpush1.msra.mxu0 0.0
        %2131 = vmatprep.subr.mxu0 0.0
        %2132 = vmatpush1.msra.mxu0 0.0
        %2133 = vmatprep.subr.mxu0 0.0
        %2134 = vmatpush1.msra.mxu0 0.0
        %2135 = vmatprep.subr.mxu0 0.0
        %2136 = vmatpush1.msra.mxu0 0.0
        %2137 = vmatprep.subr.mxu0 0.0
        %2138 = vmatpush1.msra.mxu0 0.0
        %2139 = vmatprep.subr.mxu0 0.0
        %2140 = vmatpush1.msra.mxu0 0.0
        %2141 = vmatprep.subr.mxu0 0.0
        %2142 = vmatpush1.msra.mxu0 0.0
        %2143 = vmatprep.subr.mxu0 0.0
        %2144 = vmatpush1.msra.mxu0 0.0
        %2145 = vmatprep.subr.mxu0 0.0
        %2146 = vmatpush1.msra.mxu0 0.0
        %2147 = vmatprep.subr.mxu0 0.0
        %2148 = vmatpush1.msra.mxu0 0.0
        %2149 = vmatprep.subr.mxu0 0.0
        %2150 = vmatpush1.msra.mxu0 0.0
        %2151 = vmatprep.mubr.f32.mxu0 0.0
        %v2152 = vand.u32 %v1823, 4294901760
        %v2153 = vsub.f32 %v1823, %v2152
        %v2154 = vand.u32 %v2153, 4294901760
        %2155 = vmatmul.mubr.f32.gmra.mrb[0].mxu0 %v2154
        %v2156 = vpop.f32.mrb[0].mxu0
        %v2157 = vadd.f32 %v2075, %v2156
        %v2158 = vpop.f32.mrb[0].mxu0
        %2159 = vmatprep.mubr.f32.mxu0 0.0
        %v2160 = vand.u32 %v1826, 4294901760
        %v2161 = vsub.f32 %v1826, %v2160
        %v2162 = vand.u32 %v2161, 4294901760
        %2163 = vmatmul.mubr.f32.gmra.mrb[0].mxu0 %v2162
        %v2164 = vpop.f32.mrb[0].mxu0
        %v2165 = vadd.f32 %v2082, %v2164
        %v2166 = vpop.f32.mrb[0].mxu0
        %2167 = vdwg.mxu0
        %2168 = vmatprep.subr.mxu0 0.0
        %v2169 = vand.u32 %v184, 4294901760
        %v2170 = vsub.f32 %v184, %v2169
        %v2171 = vand.u32 %v2170, 4294901760
        %2172 = vmatpush1.msra.mxu0 %v2171
        %2173 = vmatprep.subr.mxu0 0.0
        %v2174 = vand.u32 %v185, 4294901760
        %v2175 = vsub.f32 %v185, %v2174
        %v2176 = vand.u32 %v2175, 4294901760
        %2177 = vmatpush1.msra.mxu0 %v2176
        %2178 = vmatprep.subr.mxu0 0.0
        %2179 = vmatpush1.msra.mxu0 0.0
        %2180 = vmatprep.subr.mxu0 0.0
        %2181 = vmatpush1.msra.mxu0 0.0
        %2182 = vmatprep.subr.mxu0 0.0
        %2183 = vmatpush1.msra.mxu0 0.0
        %2184 = vmatprep.subr.mxu0 0.0
        %2185 = vmatpush1.msra.mxu0 0.0
        %2186 = vmatprep.subr.mxu0 0.0
        %2187 = vmatpush1.msra.mxu0 0.0
        %2188 = vmatprep.subr.mxu0 0.0
        %2189 = vmatpush1.msra.mxu0 0.0
        %2190 = vmatprep.subr.mxu0 0.0
        %2191 = vmatpush1.msra.mxu0 0.0
        %2192 = vmatprep.subr.mxu0 0.0
        %2193 = vmatpush1.msra.mxu0 0.0
        %2194 = vmatprep.subr.mxu0 0.0
        %2195 = vmatpush1.msra.mxu0 0.0
        %2196 = vmatprep.subr.mxu0 0.0
        %2197 = vmatpush1.msra.mxu0 0.0
        %2198 = vmatprep.subr.mxu0 0.0
        %2199 = vmatpush1.msra.mxu0 0.0
        %2200 = vmatprep.subr.mxu0 0.0
        %2201 = vmatpush1.msra.mxu0 0.0
        %2202 = vmatprep.subr.mxu0 0.0
        %2203 = vmatpush1.msra.mxu0 0.0
        %2204 = vmatprep.subr.mxu0 0.0
        %2205 = vmatpush1.msra.mxu0 0.0
        %2206 = vmatprep.subr.mxu0 0.0
        %2207 = vmatpush1.msra.mxu0 0.0
        %2208 = vmatprep.subr.mxu0 0.0
        %2209 = vmatpush1.msra.mxu0 0.0
        %2210 = vmatprep.subr.mxu0 0.0
        %2211 = vmatpush1.msra.mxu0 0.0
        %2212 = vmatprep.subr.mxu0 0.0
        %2213 = vmatpush1.msra.mxu0 0.0
        %2214 = vmatprep.subr.mxu0 0.0
        %2215 = vmatpush1.msra.mxu0 0.0
        %2216 = vmatprep.subr.mxu0 0.0
        %2217 = vmatpush1.msra.mxu0 0.0
        %2218 = vmatprep.subr.mxu0 0.0
        %2219 = vmatpush1.msra.mxu0 0.0
        %2220 = vmatprep.subr.mxu0 0.0
        %2221 = vmatpush1.msra.mxu0 0.0
        %2222 = vmatprep.subr.mxu0 0.0
        %2223 = vmatpush1.msra.mxu0 0.0
        %2224 = vmatprep.subr.mxu0 0.0
        %2225 = vmatpush1.msra.mxu0 0.0
        %2226 = vmatprep.subr.mxu0 0.0
        %2227 = vmatpush1.msra.mxu0 0.0
        %2228 = vmatprep.subr.mxu0 0.0
        %2229 = vmatpush1.msra.mxu0 0.0
        %2230 = vmatprep.subr.mxu0 0.0
        %2231 = vmatpush1.msra.mxu0 0.0
        %2232 = vmatprep.subr.mxu0 0.0
        %2233 = vmatpush1.msra.mxu0 0.0
        %2234 = vmatprep.subr.mxu0 0.0
        %2235 = vmatpush1.msra.mxu0 0.0
        %2236 = vmatprep.subr.mxu0 0.0
        %2237 = vmatpush1.msra.mxu0 0.0
        %2238 = vmatprep.mubr.f32.mxu0 0.0
        %v2239 = vand.u32 %v1823, 4294901760
        %2240 = vmatmul.mubr.f32.gmra.mrb[0].mxu0 %v2239
        %v2241 = vpop.f32.mrb[0].mxu0
        %v2242 = vadd.f32 %v2157, %v2241
        %v2243 = vpop.f32.mrb[0].mxu0
        %2244 = vmatprep.mubr.f32.mxu0 0.0
        %v2245 = vand.u32 %v1826, 4294901760
        %2246 = vmatmul.mubr.f32.gmra.mrb[0].mxu0 %v2245
        %v2247 = vpop.f32.mrb[0].mxu0
        %v2248 = vadd.f32 %v2165, %v2247
        %v2249 = vpop.f32.mrb[0].mxu0
        %2250 = vdwg.mxu0
        %2251 = vmatprep.subr.mxu0 0.0
        %v2252 = vand.u32 %v184, 4294901760
        %2253 = vmatpush1.msra.mxu0 %v2252
        %2254 = vmatprep.subr.mxu0 0.0
        %v2255 = vand.u32 %v185, 4294901760
        %2256 = vmatpush1.msra.mxu0 %v2255
        %2257 = vmatprep.subr.mxu0 0.0
        %2258 = vmatpush1.msra.mxu0 0.0
        %2259 = vmatprep.subr.mxu0 0.0
        %2260 = vmatpush1.msra.mxu0 0.0
        %2261 = vmatprep.subr.mxu0 0.0
        %2262 = vmatpush1.msra.mxu0 0.0
        %2263 = vmatprep.subr.mxu0 0.0
        %2264 = vmatpush1.msra.mxu0 0.0
        %2265 = vmatprep.subr.mxu0 0.0
        %2266 = vmatpush1.msra.mxu0 0.0
        %2267 = vmatprep.subr.mxu0 0.0
        %2268 = vmatpush1.msra.mxu0 0.0
        %2269 = vmatprep.subr.mxu0 0.0
        %2270 = vmatpush1.msra.mxu0 0.0
        %2271 = vmatprep.subr.mxu0 0.0
        %2272 = vmatpush1.msra.mxu0 0.0
        %2273 = vmatprep.subr.mxu0 0.0
        %2274 = vmatpush1.msra.mxu0 0.0
        %2275 = vmatprep.subr.mxu0 0.0
        %2276 = vmatpush1.msra.mxu0 0.0
        %2277 = vmatprep.subr.mxu0 0.0
        %2278 = vmatpush1.msra.mxu0 0.0
        %2279 = vmatprep.subr.mxu0 0.0
        %2280 = vmatpush1.msra.mxu0 0.0
        %2281 = vmatprep.subr.mxu0 0.0
        %2282 = vmatpush1.msra.mxu0 0.0
        %2283 = vmatprep.subr.mxu0 0.0
        %2284 = vmatpush1.msra.mxu0 0.0
        %2285 = vmatprep.subr.mxu0 0.0
        %2286 = vmatpush1.msra.mxu0 0.0
        %2287 = vmatprep.subr.mxu0 0.0
        %2288 = vmatpush1.msra.mxu0 0.0
        %2289 = vmatprep.subr.mxu0 0.0
        %2290 = vmatpush1.msra.mxu0 0.0
        %2291 = vmatprep.subr.mxu0 0.0
        %2292 = vmatpush1.msra.mxu0 0.0
        %2293 = vmatprep.subr.mxu0 0.0
        %2294 = vmatpush1.msra.mxu0 0.0
        %2295 = vmatprep.subr.mxu0 0.0
        %2296 = vmatpush1.msra.mxu0 0.0
        %2297 = vmatprep.subr.mxu0 0.0
        %2298 = vmatpush1.msra.mxu0 0.0
        %2299 = vmatprep.subr.mxu0 0.0
        %2300 = vmatpush1.msra.mxu0 0.0
        %2301 = vmatprep.subr.mxu0 0.0
        %2302 = vmatpush1.msra.mxu0 0.0
        %2303 = vmatprep.subr.mxu0 0.0
        %2304 = vmatpush1.msra.mxu0 0.0
        %2305 = vmatprep.subr.mxu0 0.0
        %2306 = vmatpush1.msra.mxu0 0.0
        %2307 = vmatprep.subr.mxu0 0.0
        %2308 = vmatpush1.msra.mxu0 0.0
        %2309 = vmatprep.subr.mxu0 0.0
        %2310 = vmatpush1.msra.mxu0 0.0
        %2311 = vmatprep.subr.mxu0 0.0
        %2312 = vmatpush1.msra.mxu0 0.0
        %2313 = vmatprep.subr.mxu0 0.0
        %2314 = vmatpush1.msra.mxu0 0.0
        %2315 = vmatprep.subr.mxu0 0.0
        %2316 = vmatpush1.msra.mxu0 0.0
        %2317 = vmatprep.mubr.f32.mxu0 0.0
        %v2318 = vand.u32 %v1823, 4294901760
        %2319 = vmatmul.mubr.f32.gmra.mrb[0].mxu0 %v2318
        %v2320 = vpop.f32.mrb[0].mxu0
        %v2321 = vadd.f32 %v2242, %v2320
        %v2322 = vpop.f32.mrb[0].mxu0
        %2323 = vmatprep.mubr.f32.mxu0 0.0
        %v2324 = vand.u32 %v1826, 4294901760
        %2325 = vmatmul.mubr.f32.gmra.mrb[0].mxu0 %v2324
        %v2326 = vpop.f32.mrb[0].mxu0
        %v2327 = vadd.f32 %v2248, %v2326
        %v2328 = vpop.f32.mrb[0].mxu0
        %2329 = vdwg.mxu0
        %s2330 = scalar_lea.vmem %s182, 48
        %2331 = vst.msk [vmem:[%s2330] sm:$0xff] %vm721, %v2321
        %2332 = vst.msk [vmem:[%s2330 + $0x8] sm:$0x3f] %vm723, %v2327
        %s2333 = smul.u32 4, %s17
        %p2334 = scmp.lt.s32.totalorder %s2333, 7
        %s2335 = scalar_select %p2334, %s2333, 7
        %s2336 = smul.addr %s2335, 2
        %s2337 = smul.addr %s2336, 8
        %s2338 = scalar_lea.vmem %s2, %s2337
        // Predicated region
        $region37: #{tpu_custom_call.1} parent=27 // pred_check
          %p2339 = pneg %p82
        $region38: #{tpu_custom_call.1} parent=27 // pred_check_branch
          %2341 = sbr.rel (%p2339) target = $region40
        $region39: #{tpu_custom_call.1} parent=27 // pred_region
          %s2342 = smul.u32 4, %s17
        $region40: #{tpu_custom_call.1} parent=27 // pred_fallthru
          _
      $region28: #{tpu_custom_call.1} parent=5 // pred_fallthru
        _
      %p2343 = scmp.le.s32.totalorder 2, %s12
      // Predicated region
      $region41: #{tpu_custom_call.1} parent=5 // pred_check
        %p2344 = pneg %p2343
      $region42: #{tpu_custom_call.1} parent=5 // pred_check_branch
        %2346 = sbr.rel (%p2344) target = $region44
      $region43: #{tpu_custom_call.1} parent=5 // pred_region
        %s2347 = ssub.s32 %s12, 2
        // Predicated region
        $region45: #{tpu_custom_call.1} parent=43 // pred_check
          %p2348 = pneg %p88
        $region46: #{tpu_custom_call.1} parent=43 // pred_check_branch
          %2350 = sbr.rel (%p2348) target = $region48
        $region47: #{tpu_custom_call.1} parent=43 // pred_region
          %s2351 = smul.u32 4, %s18
          %p2352 = scmp.lt.s32.totalorder %s2351, 7
          %s2353 = scalar_select %p2352, %s2351, 7
          %s2354 = smul.addr %s2353, 2
          %s2355 = smul.addr %s2354, 8
          %s2356 = scalar_lea.vmem %s2, %s2355
        $region48: #{tpu_custom_call.1} parent=43 // pred_fallthru
          _
      $region44: #{tpu_custom_call.1} parent=5 // pred_fallthru
        _
    $region6: #{tpu_custom_call.1} parent=1 // loop_footer
      %s16 = sadd.s32 1, %s12
    $region7: #{tpu_custom_call.1} parent=1 // loop_footer_branch
      %11 = sbr.rel target = $region3
    $region8: #{tpu_custom_call.1} parent=1 // loop_exit
      _
    %2357 = vsyncpa [#allocation3], 1
    %s2358 = scalar_lea.sflag [#allocation3], 1
    %2359 = vsyncpa %s2358, 1
    %2360 = vsyncpa [#allocation5], 1
    %s2361 = scalar_lea.sflag [#allocation5], 1
    %2362 = vsyncpa %s2361, 1

</llo_original>
